<compile_context>
chip_gen: v6e
topology: v6e:2x2x1
jax: 0.10.0
libtpu: 0.0.40
codegen_flags: <defaults>
</compile_context>

<pallas_src>
import functools

import jax
import jax.numpy as jnp
from jax.experimental import pallas as pl
from jax.experimental.pallas import tpu as pltpu


def _axial_dw_kernel(wh_ref, ww_ref, b_ref, x_ref, o_ref, xp_ref, *,
                     kh, kw, dil, pad_t, pad_b, pad_l, pad_r,
                     row_org, col_org, H, W, row_strip):
    """One (batch, channel-block) step: residual + H-axis DW conv + W-axis DW conv.

    wh_ref: (Cblk, kh, 1)   ww_ref: (Cblk, kw, 1)   b_ref: (Cblk, 1, 1)
    x_ref : (1, Cblk, H, W) o_ref : (1, Cblk, H, W)
    xp_ref: VMEM scratch (Cblk, row_org + H + pad_b, col_org + W + pad_r), f32
    """
    cblk = xp_ref.shape[0]
    f32 = xp_ref.dtype

    # ---- Zero only the halo strips the conv taps actually read. -----------
    # The H-conv taps read interior columns only; the W-conv taps read interior
    # rows only, so the corner regions are never touched.  Re-zeroed every
    # step (tiny stores) so each TensorCore's private scratch is always valid.
    if pad_t > 0:
        xp_ref[:, row_org - pad_t:row_org, col_org:col_org + W] = (
            jnp.zeros((cblk, pad_t, W), f32))
    if pad_b > 0:
        xp_ref[:, row_org + H:row_org + H + pad_b, col_org:col_org + W] = (
            jnp.zeros((cblk, pad_b, W), f32))
    if pad_l > 0:
        xp_ref[:, row_org:row_org + H, col_org - pad_l:col_org] = (
            jnp.zeros((cblk, H, pad_l), f32))
    if pad_r > 0:
        xp_ref[:, row_org:row_org + H, col_org + W:col_org + W + pad_r] = (
            jnp.zeros((cblk, H, pad_r), f32))

    # ---- Stage the valid plane at an (8,128)-aligned origin (aligned store).
    xp_ref[:, row_org:row_org + H, col_org:col_org + W] = (
        x_ref[0].astype(f32))

    r_base = row_org - pad_t          # padded-plane row 0 for the H-conv taps
    c_base = col_org - pad_l          # padded-plane col 0 for the W-conv taps

    # Tiny per-channel parameters, loaded once (hoisted out of the strip loop).
    bias = b_ref[...]                                   # (Cblk, 1, 1)
    wh_taps = [wh_ref[:, i:i + 1, :] for i in range(kh)]
    ww_taps = [ww_ref[:, j:j + 1, :] for j in range(kw)]

    # ---- Accumulate taps per H row-strip to bound vreg pressure. -----------
    for h0 in range(0, H, row_strip):
        hs = min(row_strip, H - h0)

        # residual + (bias_h + bias_w); accumulate in f32
        acc = (xp_ref[:, row_org + h0:row_org + h0 + hs, col_org:col_org + W]
               + bias)

        # depthwise conv along H (kernel (kh,1)): shifted windows read straight
        # from the scratch ref -> only `acc` stays live across taps.
        for i in range(kh):
            r0 = r_base + h0 + i * dil
            acc = acc + wh_taps[i] * \
                xp_ref[:, r0:r0 + hs, col_org:col_org + W]

        # depthwise conv along W (kernel (1,kw))
        for j in range(kw):
            c0 = c_base + j * dil
            acc = acc + ww_taps[j] * \
                xp_ref[:, row_org + h0:row_org + h0 + hs, c0:c0 + W]

        o_ref[0, :, h0:h0 + hs, :] = acc.astype(o_ref.dtype)


def _pick_channel_block(N, C, H, W, SH, SW, itemsize):
    """Largest divisor of C whose per-step VMEM footprint fits a modest budget,
    preferring a grid with >= 2 total steps (so both TensorCores get work)."""
    budget = 8 * 1024 * 1024
    sub = lambda n: -(-n // 8) * 8
    lane = lambda n: -(-n // 128) * 128

    def step_bytes(cb):
        io = cb * sub(H) * lane(W) * max(int(itemsize), 4)      # in + out blocks
        scratch = cb * sub(SH) * lane(SW) * 4
        params = 3 * cb * 8 * 128 * 4                           # (cb,k,1) tiles
        return 4 * io + scratch + 2 * params                    # dbl-buffered IO

    divisors = [d for d in range(C, 0, -1) if C % d == 0]
    fitting = [d for d in divisors if step_bytes(d) <= budget] or [1]
    for d in fitting:
        if N * (C // d) >= 2:
            return d
    return fitting[0]


def _pick_row_strip(cblk, H, W):
    """Rows per in-kernel strip so the f32 accumulator stays ~<= 16 vregs."""
    lane_groups = -(-W // 128)
    sub_groups = max(1, 16 // max(1, cblk * lane_groups))
    return min(H, sub_groups * 8)


def axial_dw(x, wh, ww, bh, bw, *, mixer_kernel, dilation=1):
    """AxialDW forward.  x: (N,C,H,W); wh: (C,kh); ww: (C,kw); bh,bw: (C,)."""
    N, C, H, W = x.shape
    kh, kw = mixer_kernel
    tot_h = dilation * (kh - 1)
    tot_w = dilation * (kw - 1)
    pad_t, pad_b = tot_h // 2, tot_h - tot_h // 2     # PyTorch 'same' split
    pad_l, pad_r = tot_w // 2, tot_w - tot_w // 2

    # (8,128)-aligned origin for the staged block inside the halo scratch.
    row_org = -(-pad_t // 8) * 8
    col_org = -(-pad_l // 128) * 128
    SH = row_org + H + pad_b
    SW = col_org + W + pad_r

    cblk = _pick_channel_block(N, C, H, W, SH, SW, x.dtype.itemsize)
    row_strip = _pick_row_strip(cblk, H, W)

    # Per-channel parameters reshaped (metadata-only, no transpose) so an
    # in-kernel static ref slice yields a (cblk,1,1) value that broadcasts over
    # the (cblk,H,W) tile without relayout. The two biases are folded once.
    wh3 = wh.astype(jnp.float32).reshape(C, kh, 1)
    ww3 = ww.astype(jnp.float32).reshape(C, kw, 1)
    b3 = (bh + bw).astype(jnp.float32).reshape(C, 1, 1)

    kernel = functools.partial(
        _axial_dw_kernel, kh=kh, kw=kw, dil=dilation,
        pad_t=pad_t, pad_b=pad_b, pad_l=pad_l, pad_r=pad_r,
        row_org=row_org, col_org=col_org,
        H=H, W=W, row_strip=row_strip)

    flops = 2 * N * C * H * W * (kh + kw + 1)
    bytes_accessed = (2 * x.size * x.dtype.itemsize
                      + 4 * (wh3.size + ww3.size + b3.size))

    return pl.pallas_call(
        kernel,
        out_shape=jax.ShapeDtypeStruct((N, C, H, W), x.dtype),
        grid_spec=pltpu.PrefetchScalarGridSpec(
            num_scalar_prefetch=0,
            grid=(N, C // cblk),
            in_specs=[
                pl.BlockSpec((cblk, kh, 1), lambda n, c: (c, 0, 0)),   # wh
                pl.BlockSpec((cblk, kw, 1), lambda n, c: (c, 0, 0)),   # ww
                pl.BlockSpec((cblk, 1, 1), lambda n, c: (c, 0, 0)),    # bh+bw
                pl.BlockSpec((1, cblk, H, W), lambda n, c: (n, c, 0, 0)),
            ],
            # NCHW kept (no extra HBM transpose pass); the last block dim is W,
            # so stores are lane-dense whenever W >= 128.
            out_specs=pl.BlockSpec((1, cblk, H, W), lambda n, c: (n, c, 0, 0)),
            scratch_shapes=[pltpu.VMEM((cblk, SH, SW), jnp.float32)],
        ),
        compiler_params=pltpu.CompilerParams(
            dimension_semantics=("parallel", "parallel"),
            vmem_limit_bytes=32 * 1024 * 1024),
        cost_estimate=pl.CostEstimate(
            flops=flops, transcendentals=0, bytes_accessed=bytes_accessed),
    )(wh3, ww3, b3, x)


def _ref_axial_dw(x, wh, ww, bh, bw, *, dilation=1):
    """Pure-JAX reference (lax conv) matching PyTorch semantics exactly."""
    C = x.shape[1]
    kh, kw = wh.shape[1], ww.shape[1]
    tot_h = dilation * (kh - 1)
    tot_w = dilation * (kw - 1)
    yh = jax.lax.conv_general_dilated(
        x, wh.reshape(C, 1, kh, 1), window_strides=(1, 1),
        padding=((tot_h // 2, tot_h - tot_h // 2), (0, 0)),
        rhs_dilation=(dilation, dilation),
        dimension_numbers=("NCHW", "OIHW", "NCHW"),
        feature_group_count=C) + bh.reshape(1, C, 1, 1)
    yw = jax.lax.conv_general_dilated(
        x, ww.reshape(C, 1, 1, kw), window_strides=(1, 1),
        padding=((0, 0), (tot_w // 2, tot_w - tot_w // 2)),
        rhs_dilation=(dilation, dilation),
        dimension_numbers=("NCHW", "OIHW", "NCHW"),
        feature_group_count=C) + bw.reshape(1, C, 1, 1)
    return x + yh + yw


if __name__ == "__main__":
    key = jax.random.PRNGKey(0)

    configs = [
        # (N, C, H, W, (kh, kw), dilation)
        (2, 4, 16, 16, (7, 7), 1),     # main small demo (dim=4, mixer=(7,7))
        (1, 8, 24, 20, (3, 5), 2),     # exercises channel blocking + dilation
    ]

    for (N, C, H, W, (KH, KW), DIL) in configs:
        key, kx, kwh, kww, kbh, kbw = jax.random.split(key, 6)
        x = jax.random.normal(kx, (N, C, H, W), dtype=jnp.float32)
        # Conv2d weights: dw_h (C,1,kh,1) -> (C,kh); dw_w (C,1,1,kw) -> (C,kw)
        wh = jax.random.normal(kwh, (C, KH), dtype=jnp.float32) * 0.1
        ww = jax.random.normal(kww, (C, KW), dtype=jnp.float32) * 0.1
        bh = jax.random.normal(kbh, (C,), dtype=jnp.float32) * 0.1
        bw = jax.random.normal(kbw, (C,), dtype=jnp.float32) * 0.1

        out = axial_dw(x, wh, ww, bh, bw, mixer_kernel=(KH, KW), dilation=DIL)
        out = jax.block_until_ready(out)

        ref = _ref_axial_dw(x, wh, ww, bh, bw, dilation=DIL)
        assert out.shape == (N, C, H, W) and out.dtype == x.dtype
        if not jnp.allclose(out, ref, atol=1e-5, rtol=1e-5):
            raise AssertionError(
                f"Pallas AxialDW mismatch: N={N} C={C} H={H} W={W} "
                f"k=({KH},{KW}) dil={DIL}")

    print("KERNEL_OK")
</pallas_src>

<mosaic_0001>
module attributes {stable_mosaic.version = 11 : i64} {
  func.func @_axial_dw_kernel(%arg0: i32, %arg1: i32, %arg2: memref<4x7x1xf32, #tpu.memory_space<vmem>>, %arg3: memref<4x7x1xf32, #tpu.memory_space<vmem>>, %arg4: memref<4x1x1xf32, #tpu.memory_space<vmem>>, %arg5: memref<1x4x16x16xf32, #tpu.memory_space<vmem>>, %arg6: memref<1x4x16x16xf32, #tpu.memory_space<vmem>>, %arg7: memref<4x27x147xf32, #tpu.memory_space<vmem>>) attributes {dimension_semantics = [#tpu.dimension_semantics<parallel>, #tpu.dimension_semantics<parallel>], iteration_bounds = array<i64: 2, 1>, scalar_prefetch = 0 : i64, scratch_operands = 1 : i64, tpu.core_type = #tpu.core_type<tc>, window_params = [{transform_indices = @transform_0, window_bounds = array<i64: 4, 7, 1>}, {transform_indices = @transform_1, window_bounds = array<i64: 4, 7, 1>}, {transform_indices = @transform_2, window_bounds = array<i64: 4, 1, 1>}, {transform_indices = @transform_3, window_bounds = array<i64: 1, 4, 16, 16>}, {transform_indices = @transform_4, window_bounds = array<i64: 1, 4, 16, 16>}]} {
    %cst = arith.constant 0.000000e+00 : f32
    %0 = vector.broadcast %cst : f32 to vector<4x3x16xf32>
    %c0 = arith.constant 0 : index
    %c5 = arith.constant 5 : index
    %c128 = arith.constant 128 : index
    %1 = vector.load %arg7[%c0, %c5, %c128] : memref<4x27x147xf32, #tpu.memory_space<vmem>>, vector<4x3x16xf32>
    tpu.vector_store %arg7[%c0, %c5, %c128], %0 {strides = array<i32>} : memref<4x27x147xf32, #tpu.memory_space<vmem>>, vector<4x3x16xf32>,
    %cst_0 = arith.constant 0.000000e+00 : f32
    %2 = vector.broadcast %cst_0 : f32 to vector<4x3x16xf32>
    %c0_1 = arith.constant 0 : index
    %c24 = arith.constant 24 : index
    %c128_2 = arith.constant 128 : index
    %3 = vector.load %arg7[%c0_1, %c24, %c128_2] : memref<4x27x147xf32, #tpu.memory_space<vmem>>, vector<4x3x16xf32>
    tpu.vector_store %arg7[%c0_1, %c24, %c128_2], %2 {strides = array<i32>} : memref<4x27x147xf32, #tpu.memory_space<vmem>>, vector<4x3x16xf32>,
    %cst_3 = arith.constant 0.000000e+00 : f32
    %4 = vector.broadcast %cst_3 : f32 to vector<4x16x3xf32>
    %c0_4 = arith.constant 0 : index
    %c8 = arith.constant 8 : index
    %c125 = arith.constant 125 : index
    %5 = vector.load %arg7[%c0_4, %c8, %c125] : memref<4x27x147xf32, #tpu.memory_space<vmem>>, vector<4x16x3xf32>
    tpu.vector_store %arg7[%c0_4, %c8, %c125], %4 {strides = array<i32>} : memref<4x27x147xf32, #tpu.memory_space<vmem>>, vector<4x16x3xf32>,
    %cst_5 = arith.constant 0.000000e+00 : f32
    %6 = vector.broadcast %cst_5 : f32 to vector<4x16x3xf32>
    %c0_6 = arith.constant 0 : index
    %c8_7 = arith.constant 8 : index
    %c144 = arith.constant 144 : index
    %7 = vector.load %arg7[%c0_6, %c8_7, %c144] : memref<4x27x147xf32, #tpu.memory_space<vmem>>, vector<4x16x3xf32>
    tpu.vector_store %arg7[%c0_6, %c8_7, %c144], %6 {strides = array<i32>} : memref<4x27x147xf32, #tpu.memory_space<vmem>>, vector<4x16x3xf32>,
    %c0_8 = arith.constant 0 : index
    %c0_9 = arith.constant 0 : index
    %c0_10 = arith.constant 0 : index
    %c0_11 = arith.constant 0 : index
    %8 = vector.load %arg5[%c0_8, %c0_9, %c0_10, %c0_11] : memref<1x4x16x16xf32, #tpu.memory_space<vmem>>, vector<1x4x16x16xf32>
    %9 = vector.shape_cast %8 : vector<1x4x16x16xf32> to vector<4x16x16xf32>
    %c0_12 = arith.constant 0 : index
    %c8_13 = arith.constant 8 : index
    %c128_14 = arith.constant 128 : index
    %10 = vector.load %arg7[%c0_12, %c8_13, %c128_14] : memref<4x27x147xf32, #tpu.memory_space<vmem>>, vector<4x16x16xf32>
    tpu.vector_store %arg7[%c0_12, %c8_13, %c128_14], %9 {strides = array<i32>} : memref<4x27x147xf32, #tpu.memory_space<vmem>>, vector<4x16x16xf32>,
    %c0_15 = arith.constant 0 : index
    %c0_16 = arith.constant 0 : index
    %c0_17 = arith.constant 0 : index
    %11 = vector.load %arg4[%c0_15, %c0_16, %c0_17] : memref<4x1x1xf32, #tpu.memory_space<vmem>>, vector<4x1x1xf32>
    %c0_18 = arith.constant 0 : index
    %c0_19 = arith.constant 0 : index
    %c0_20 = arith.constant 0 : index
    %12 = vector.load %arg2[%c0_18, %c0_19, %c0_20] : memref<4x7x1xf32, #tpu.memory_space<vmem>>, vector<4x1x1xf32>
    %c0_21 = arith.constant 0 : index
    %c1 = arith.constant 1 : index
    %c0_22 = arith.constant 0 : index
    %13 = vector.load %arg2[%c0_21, %c1, %c0_22] : memref<4x7x1xf32, #tpu.memory_space<vmem>>, vector<4x1x1xf32>
    %c0_23 = arith.constant 0 : index
    %c2 = arith.constant 2 : index
    %c0_24 = arith.constant 0 : index
    %14 = vector.load %arg2[%c0_23, %c2, %c0_24] : memref<4x7x1xf32, #tpu.memory_space<vmem>>, vector<4x1x1xf32>
    %c0_25 = arith.constant 0 : index
    %c3 = arith.constant 3 : index
    %c0_26 = arith.constant 0 : index
    %15 = vector.load %arg2[%c0_25, %c3, %c0_26] : memref<4x7x1xf32, #tpu.memory_space<vmem>>, vector<4x1x1xf32>
    %c0_27 = arith.constant 0 : index
    %c4 = arith.constant 4 : index
    %c0_28 = arith.constant 0 : index
    %16 = vector.load %arg2[%c0_27, %c4, %c0_28] : memref<4x7x1xf32, #tpu.memory_space<vmem>>, vector<4x1x1xf32>
    %c0_29 = arith.constant 0 : index
    %c5_30 = arith.constant 5 : index
    %c0_31 = arith.constant 0 : index
    %17 = vector.load %arg2[%c0_29, %c5_30, %c0_31] : memref<4x7x1xf32, #tpu.memory_space<vmem>>, vector<4x1x1xf32>
    %c0_32 = arith.constant 0 : index
    %c6 = arith.constant 6 : index
    %c0_33 = arith.constant 0 : index
    %18 = vector.load %arg2[%c0_32, %c6, %c0_33] : memref<4x7x1xf32, #tpu.memory_space<vmem>>, vector<4x1x1xf32>
    %c0_34 = arith.constant 0 : index
    %c0_35 = arith.constant 0 : index
    %c0_36 = arith.constant 0 : index
    %19 = vector.load %arg3[%c0_34, %c0_35, %c0_36] : memref<4x7x1xf32, #tpu.memory_space<vmem>>, vector<4x1x1xf32>
    %c0_37 = arith.constant 0 : index
    %c1_38 = arith.constant 1 : index
    %c0_39 = arith.constant 0 : index
    %20 = vector.load %arg3[%c0_37, %c1_38, %c0_39] : memref<4x7x1xf32, #tpu.memory_space<vmem>>, vector<4x1x1xf32>
    %c0_40 = arith.constant 0 : index
    %c2_41 = arith.constant 2 : index
    %c0_42 = arith.constant 0 : index
    %21 = vector.load %arg3[%c0_40, %c2_41, %c0_42] : memref<4x7x1xf32, #tpu.memory_space<vmem>>, vector<4x1x1xf32>
    %c0_43 = arith.constant 0 : index
    %c3_44 = arith.constant 3 : index
    %c0_45 = arith.constant 0 : index
    %22 = vector.load %arg3[%c0_43, %c3_44, %c0_45] : memref<4x7x1xf32, #tpu.memory_space<vmem>>, vector<4x1x1xf32>
    %c0_46 = arith.constant 0 : index
    %c4_47 = arith.constant 4 : index
    %c0_48 = arith.constant 0 : index
    %23 = vector.load %arg3[%c0_46, %c4_47, %c0_48] : memref<4x7x1xf32, #tpu.memory_space<vmem>>, vector<4x1x1xf32>
    %c0_49 = arith.constant 0 : index
    %c5_50 = arith.constant 5 : index
    %c0_51 = arith.constant 0 : index
    %24 = vector.load %arg3[%c0_49, %c5_50, %c0_51] : memref<4x7x1xf32, #tpu.memory_space<vmem>>, vector<4x1x1xf32>
    %c0_52 = arith.constant 0 : index
    %c6_53 = arith.constant 6 : index
    %c0_54 = arith.constant 0 : index
    %25 = vector.load %arg3[%c0_52, %c6_53, %c0_54] : memref<4x7x1xf32, #tpu.memory_space<vmem>>, vector<4x1x1xf32>
    %c0_55 = arith.constant 0 : index
    %c8_56 = arith.constant 8 : index
    %c128_57 = arith.constant 128 : index
    %26 = vector.load %arg7[%c0_55, %c8_56, %c128_57] : memref<4x27x147xf32, #tpu.memory_space<vmem>>, vector<4x16x16xf32>
    %27 = vector.broadcast %11 : vector<4x1x1xf32> to vector<4x16x16xf32>
    %28 = arith.addf %26, %27 : vector<4x16x16xf32>
    %c0_58 = arith.constant 0 : index
    %c5_59 = arith.constant 5 : index
    %c128_60 = arith.constant 128 : index
    %29 = vector.load %arg7[%c0_58, %c5_59, %c128_60] : memref<4x27x147xf32, #tpu.memory_space<vmem>>, vector<4x16x16xf32>
    %30 = vector.broadcast %12 : vector<4x1x1xf32> to vector<4x16x16xf32>
    %31 = arith.mulf %30, %29 : vector<4x16x16xf32>
    %32 = arith.addf %28, %31 : vector<4x16x16xf32>
    %c0_61 = arith.constant 0 : index
    %c6_62 = arith.constant 6 : index
    %c128_63 = arith.constant 128 : index
    %33 = vector.load %arg7[%c0_61, %c6_62, %c128_63] : memref<4x27x147xf32, #tpu.memory_space<vmem>>, vector<4x16x16xf32>
    %34 = vector.broadcast %13 : vector<4x1x1xf32> to vector<4x16x16xf32>
    %35 = arith.mulf %34, %33 : vector<4x16x16xf32>
    %36 = arith.addf %32, %35 : vector<4x16x16xf32>
    %c0_64 = arith.constant 0 : index
    %c7 = arith.constant 7 : index
    %c128_65 = arith.constant 128 : index
    %37 = vector.load %arg7[%c0_64, %c7, %c128_65] : memref<4x27x147xf32, #tpu.memory_space<vmem>>, vector<4x16x16xf32>
    %38 = vector.broadcast %14 : vector<4x1x1xf32> to vector<4x16x16xf32>
    %39 = arith.mulf %38, %37 : vector<4x16x16xf32>
    %40 = arith.addf %36, %39 : vector<4x16x16xf32>
    %c0_66 = arith.constant 0 : index
    %c8_67 = arith.constant 8 : index
    %c128_68 = arith.constant 128 : index
    %41 = vector.load %arg7[%c0_66, %c8_67, %c128_68] : memref<4x27x147xf32, #tpu.memory_space<vmem>>, vector<4x16x16xf32>
    %42 = vector.broadcast %15 : vector<4x1x1xf32> to vector<4x16x16xf32>
    %43 = arith.mulf %42, %41 : vector<4x16x16xf32>
    %44 = arith.addf %40, %43 : vector<4x16x16xf32>
    %c0_69 = arith.constant 0 : index
    %c9 = arith.constant 9 : index
    %c128_70 = arith.constant 128 : index
    %45 = vector.load %arg7[%c0_69, %c9, %c128_70] : memref<4x27x147xf32, #tpu.memory_space<vmem>>, vector<4x16x16xf32>
    %46 = vector.broadcast %16 : vector<4x1x1xf32> to vector<4x16x16xf32>
    %47 = arith.mulf %46, %45 : vector<4x16x16xf32>
    %48 = arith.addf %44, %47 : vector<4x16x16xf32>
    %c0_71 = arith.constant 0 : index
    %c10 = arith.constant 10 : index
    %c128_72 = arith.constant 128 : index
    %49 = vector.load %arg7[%c0_71, %c10, %c128_72] : memref<4x27x147xf32, #tpu.memory_space<vmem>>, vector<4x16x16xf32>
    %50 = vector.broadcast %17 : vector<4x1x1xf32> to vector<4x16x16xf32>
    %51 = arith.mulf %50, %49 : vector<4x16x16xf32>
    %52 = arith.addf %48, %51 : vector<4x16x16xf32>
    %c0_73 = arith.constant 0 : index
    %c11 = arith.constant 11 : index
    %c128_74 = arith.constant 128 : index
    %53 = vector.load %arg7[%c0_73, %c11, %c128_74] : memref<4x27x147xf32, #tpu.memory_space<vmem>>, vector<4x16x16xf32>
    %54 = vector.broadcast %18 : vector<4x1x1xf32> to vector<4x16x16xf32>
    %55 = arith.mulf %54, %53 : vector<4x16x16xf32>
    %56 = arith.addf %52, %55 : vector<4x16x16xf32>
    %c0_75 = arith.constant 0 : index
    %c8_76 = arith.constant 8 : index
    %c125_77 = arith.constant 125 : index
    %57 = vector.load %arg7[%c0_75, %c8_76, %c125_77] : memref<4x27x147xf32, #tpu.memory_space<vmem>>, vector<4x16x16xf32>
    %58 = vector.broadcast %19 : vector<4x1x1xf32> to vector<4x16x16xf32>
    %59 = arith.mulf %58, %57 : vector<4x16x16xf32>
    %60 = arith.addf %56, %59 : vector<4x16x16xf32>
    %c0_78 = arith.constant 0 : index
    %c8_79 = arith.constant 8 : index
    %c126 = arith.constant 126 : index
    %61 = vector.load %arg7[%c0_78, %c8_79, %c126] : memref<4x27x147xf32, #tpu.memory_space<vmem>>, vector<4x16x16xf32>
    %62 = vector.broadcast %20 : vector<4x1x1xf32> to vector<4x16x16xf32>
    %63 = arith.mulf %62, %61 : vector<4x16x16xf32>
    %64 = arith.addf %60, %63 : vector<4x16x16xf32>
    %c0_80 = arith.constant 0 : index
    %c8_81 = arith.constant 8 : index
    %c127 = arith.constant 127 : index
    %65 = vector.load %arg7[%c0_80, %c8_81, %c127] : memref<4x27x147xf32, #tpu.memory_space<vmem>>, vector<4x16x16xf32>
    %66 = vector.broadcast %21 : vector<4x1x1xf32> to vector<4x16x16xf32>
    %67 = arith.mulf %66, %65 : vector<4x16x16xf32>
    %68 = arith.addf %64, %67 : vector<4x16x16xf32>
    %c0_82 = arith.constant 0 : index
    %c8_83 = arith.constant 8 : index
    %c128_84 = arith.constant 128 : index
    %69 = vector.load %arg7[%c0_82, %c8_83, %c128_84] : memref<4x27x147xf32, #tpu.memory_space<vmem>>, vector<4x16x16xf32>
    %70 = vector.broadcast %22 : vector<4x1x1xf32> to vector<4x16x16xf32>
    %71 = arith.mulf %70, %69 : vector<4x16x16xf32>
    %72 = arith.addf %68, %71 : vector<4x16x16xf32>
    %c0_85 = arith.constant 0 : index
    %c8_86 = arith.constant 8 : index
    %c129 = arith.constant 129 : index
    %73 = vector.load %arg7[%c0_85, %c8_86, %c129] : memref<4x27x147xf32, #tpu.memory_space<vmem>>, vector<4x16x16xf32>
    %74 = vector.broadcast %23 : vector<4x1x1xf32> to vector<4x16x16xf32>
    %75 = arith.mulf %74, %73 : vector<4x16x16xf32>
    %76 = arith.addf %72, %75 : vector<4x16x16xf32>
    %c0_87 = arith.constant 0 : index
    %c8_88 = arith.constant 8 : index
    %c130 = arith.constant 130 : index
    %77 = vector.load %arg7[%c0_87, %c8_88, %c130] : memref<4x27x147xf32, #tpu.memory_space<vmem>>, vector<4x16x16xf32>
    %78 = vector.broadcast %24 : vector<4x1x1xf32> to vector<4x16x16xf32>
    %79 = arith.mulf %78, %77 : vector<4x16x16xf32>
    %80 = arith.addf %76, %79 : vector<4x16x16xf32>
    %c0_89 = arith.constant 0 : index
    %c8_90 = arith.constant 8 : index
    %c131 = arith.constant 131 : index
    %81 = vector.load %arg7[%c0_89, %c8_90, %c131] : memref<4x27x147xf32, #tpu.memory_space<vmem>>, vector<4x16x16xf32>
    %82 = vector.broadcast %25 : vector<4x1x1xf32> to vector<4x16x16xf32>
    %83 = arith.mulf %82, %81 : vector<4x16x16xf32>
    %84 = arith.addf %80, %83 : vector<4x16x16xf32>
    %c0_91 = arith.constant 0 : index
    %c0_92 = arith.constant 0 : index
    %c0_93 = arith.constant 0 : index
    %c0_94 = arith.constant 0 : index
    %85 = vector.load %arg6[%c0_91, %c0_92, %c0_93, %c0_94] : memref<1x4x16x16xf32, #tpu.memory_space<vmem>>, vector<1x4x16x16xf32>
    %86 = vector.shape_cast %85 : vector<1x4x16x16xf32> to vector<4x16x16xf32>
    %87 = vector.shape_cast %84 : vector<4x16x16xf32> to vector<1x4x16x16xf32>
    tpu.vector_store %arg6[%c0_91, %c0_92, %c0_93, %c0_94], %87 {strides = array<i32>} : memref<1x4x16x16xf32, #tpu.memory_space<vmem>>, vector<1x4x16x16xf32>,
    return
  }
  func.func @transform_0(%arg0: i32, %arg1: i32) -> (i32, i32, i32) {
    %c0_i32 = arith.constant 0 : i32
    %c0_i32_0 = arith.constant 0 : i32
    %c0_i32_1 = arith.constant 0 : i32
    return %arg1, %c0_i32, %c0_i32_0 : i32, i32, i32
  }
  func.func @transform_1(%arg0: i32, %arg1: i32) -> (i32, i32, i32) {
    %c0_i32 = arith.constant 0 : i32
    %c0_i32_0 = arith.constant 0 : i32
    %c0_i32_1 = arith.constant 0 : i32
    return %arg1, %c0_i32, %c0_i32_0 : i32, i32, i32
  }
  func.func @transform_2(%arg0: i32, %arg1: i32) -> (i32, i32, i32) {
    %c0_i32 = arith.constant 0 : i32
    %c0_i32_0 = arith.constant 0 : i32
    %c0_i32_1 = arith.constant 0 : i32
    return %arg1, %c0_i32, %c0_i32_0 : i32, i32, i32
  }
  func.func @transform_3(%arg0: i32, %arg1: i32) -> (i32, i32, i32, i32) {
    %c0_i32 = arith.constant 0 : i32
    %c0_i32_0 = arith.constant 0 : i32
    %c0_i32_1 = arith.constant 0 : i32
    return %arg0, %arg1, %c0_i32, %c0_i32_0 : i32, i32, i32, i32
  }
  func.func @transform_4(%arg0: i32, %arg1: i32) -> (i32, i32, i32, i32) {
    %c0_i32 = arith.constant 0 : i32
    %c0_i32_0 = arith.constant 0 : i32
    %c0_i32_1 = arith.constant 0 : i32
    return %arg0, %arg1, %c0_i32, %c0_i32_0 : i32, i32, i32, i32
  }
}

</mosaic_0001>

<llo_original>
// kernel: tpu_custom_call.1
$region0: #{tpu_custom_call.1}
  #allocation0 [shape = 'u32[]', space=smem, size = 0x4, offset = 0x4, fixed_abs, tag = 'smem constant byte address 0x4 - core index']
  #allocation1 [shape = 'u32[144,128]{1,0:T(1,128)}', space=vmem, size = 0x12000, scoped, tag = 'internal scratch']
  #allocation2 [shape = 'f32[4,27,147]{2,1,0:T(8,128)}', space=vmem, size = 0x20000, scoped, tag = 'scratch operand']
  %s0 = inlined_call_operand.vmem [shape: f32[4,7,1], index: 0, kind: input, shape index: {}]
  %s1 = inlined_call_operand.vmem [shape: f32[4,7,1], index: 1, kind: input, shape index: {}]
  %s2 = inlined_call_operand.vmem [shape: f32[4,1,1], index: 2, kind: input, shape index: {}]
  %s3 = inlined_call_operand.hbm [shape: f32[2,4,16,16], index: 3, kind: input, shape index: {}]
  %s4 = inlined_call_operand.hbm [shape: f32[2,4,16,16], index: 4, kind: output, shape index: {}]
  %s5 = sld [smem:[#allocation0]]
  $region53: #{tpu_custom_call.1} parent=0
    _
  %s7 = ssub.s32 1, %s5
  %s8 = scalar_select 0, %s7, %s5
  $region1: #{tpu_custom_call.1} parent=0
    #allocation3 [shape = 'u8[65536]{0}', space=vmem, size = 0x10000, scoped, tag = 'input window, operand 3']
    #allocation4 [shape = 's32[2]{0}', space=sflag, size = 0x8, scoped, tag = 'scoped memory for tpu_custom_call.1']
    #allocation5 [shape = 's32[2]{0}', space=sflag, size = 0x8, scoped, tag = 'scoped memory for tpu_custom_call.1']
    #allocation6 [shape = 'u8[65536]{0}', space=vmem, size = 0x10000, scoped, tag = 'output window, operand 0']
    %9 = vsyncpa [#allocation4], 0
    %s10 = scalar_lea.sflag [#allocation4], 1
    %11 = vsyncpa %s10, 0
    %12 = vsyncpa [#allocation5], 0
    %s13 = scalar_lea.sflag [#allocation5], 1
    %14 = vsyncpa %s13, 0
    loop: start=0, step=1, limit=4
    $region2: #{tpu_custom_call.1} parent=1 // loop_pre_header
      _
    $region3: #{tpu_custom_call.1} parent=1 // loop_header
      %s16 = sphi 0, %s20
      %p17 = scmp.ge.s32.totalorder %s16, 4
      %s23 = sphi 0, %s35
      %s24 = sphi 0, %s31
      %s25 = sphi 0, %s23
      %s26 = sphi 0, %s24
      %s27 = sphi 0, %s25
      %s28 = sphi 0, %s26
      %s38 = sphi 0, %s40
      %s41 = sphi 0, %s38
      %s42 = sphi 0, %s41
      %s58 = sphi 0, %s42
      %s64 = sphi 0, %s66
      %s67 = sphi 0, %s64
      %s68 = sphi 0, %s67
      %s84 = sphi 0, %s68
      %s90 = sphi 0, %s92
      %s93 = sphi 0, %s90
      %s94 = sphi 0, %s93
      %s110 = sphi 0, %s94
      %s118 = sphi 0, %s120
      %s121 = sphi 0, %s118
      %s122 = sphi 0, %s121
      %s138 = sphi 0, %s122
      %s146 = sphi 0, %s148
      %s149 = sphi 0, %s146
      %s150 = sphi 0, %s149
      %s166 = sphi 0, %s150
    $region4: #{tpu_custom_call.1} parent=1 // loop_header_branch
      %19 = sbr.rel (%p17) target = $region8
    $region5: #{tpu_custom_call.1} parent=1 // loop_body
      %s21 = ssub.s32 %s16, 1
      %s22 = ssub.s32 %s16, 2
      %s29 = sadd.s32 1, %s24
      %p30 = scmp.ge.s32.totalorder %s29, 1
      %s31 = scalar_select %p30, 0, %s29
      %s32 = sadd.s32 1, %s23
      %s33 = scalar_select %p30, %s32, %s23
      %p34 = scmp.ge.s32.totalorder %s33, 2
      %s35 = scalar_select %p34, 0, %s33
      %s36 = ssub.s32 %s24, %s31
      %p37 = scmp.eq.s32.totalorder %s36, 0
      %s39 = sadd.s32 %s38, 1
      %s40 = scalar_select %p37, %s38, %s39
      %p43 = pneg %p37
      %p44 = scmp.eq.s32.totalorder %s16, 1
      %p45 = por %p43, %p44
      %p46 = scmp.ne.s32.totalorder %s38, %s41
      %p47 = scmp.eq.s32.totalorder %s16, 0
      %p48 = por %p46, %p47
      %p49 = scmp.ne.s32.totalorder %s38, %s41
      %p50 = scmp.eq.s32.totalorder %s21, 1
      %p51 = por %p49, %p50
      %p52 = scmp.ne.s32.totalorder %s41, %s42
      %p53 = scmp.eq.s32.totalorder %s21, 0
      %p54 = por %p52, %p53
      %p55 = scmp.ne.s32.totalorder %s41, %s42
      %p56 = scmp.eq.s32.totalorder %s22, 1
      %p57 = por %p55, %p56
      %p59 = scmp.ne.s32.totalorder %s42, %s58
      %p60 = scmp.eq.s32.totalorder %s22, 0
      %p61 = por %p59, %p60
      %s62 = ssub.s32 %s24, %s31
      %p63 = scmp.eq.s32.totalorder %s62, 0
      %s65 = sadd.s32 %s64, 1
      %s66 = scalar_select %p63, %s64, %s65
      %p69 = pneg %p63
      %p70 = scmp.eq.s32.totalorder %s16, 1
      %p71 = por %p69, %p70
      %p72 = scmp.ne.s32.totalorder %s64, %s67
      %p73 = scmp.eq.s32.totalorder %s16, 0
      %p74 = por %p72, %p73
      %p75 = scmp.ne.s32.totalorder %s64, %s67
      %p76 = scmp.eq.s32.totalorder %s21, 1
      %p77 = por %p75, %p76
      %p78 = scmp.ne.s32.totalorder %s67, %s68
      %p79 = scmp.eq.s32.totalorder %s21, 0
      %p80 = por %p78, %p79
      %p81 = scmp.ne.s32.totalorder %s67, %s68
      %p82 = scmp.eq.s32.totalorder %s22, 1
      %p83 = por %p81, %p82
      %p85 = scmp.ne.s32.totalorder %s68, %s84
      %p86 = scmp.eq.s32.totalorder %s22, 0
      %p87 = por %p85, %p86
      %s88 = ssub.s32 %s24, %s31
      %p89 = scmp.eq.s32.totalorder %s88, 0
      %s91 = sadd.s32 %s90, 1
      %s92 = scalar_select %p89, %s90, %s91
      %p95 = pneg %p89
      %p96 = scmp.eq.s32.totalorder %s16, 1
      %p97 = por %p95, %p96
      %p98 = scmp.ne.s32.totalorder %s90, %s93
      %p99 = scmp.eq.s32.totalorder %s16, 0
      %p100 = por %p98, %p99
      %p101 = scmp.ne.s32.totalorder %s90, %s93
      %p102 = scmp.eq.s32.totalorder %s21, 1
      %p103 = por %p101, %p102
      %p104 = scmp.ne.s32.totalorder %s93, %s94
      %p105 = scmp.eq.s32.totalorder %s21, 0
      %p106 = por %p104, %p105
      %p107 = scmp.ne.s32.totalorder %s93, %s94
      %p108 = scmp.eq.s32.totalorder %s22, 1
      %p109 = por %p107, %p108
      %p111 = scmp.ne.s32.totalorder %s94, %s110
      %p112 = scmp.eq.s32.totalorder %s22, 0
      %p113 = por %p111, %p112
      %s114 = ssub.s32 %s23, %s35
      %s115 = ssub.s32 %s24, %s31
      %s116 = sor.u32 %s114, %s115
      %p117 = scmp.eq.s32.totalorder %s116, 0
      %s119 = sadd.s32 %s118, 1
      %s120 = scalar_select %p117, %s118, %s119
      %p123 = pneg %p117
      %p124 = scmp.eq.s32.totalorder %s16, 1
      %p125 = por %p123, %p124
      %p126 = scmp.ne.s32.totalorder %s118, %s121
      %p127 = scmp.eq.s32.totalorder %s16, 0
      %p128 = por %p126, %p127
      %p129 = scmp.ne.s32.totalorder %s118, %s121
      %p130 = scmp.eq.s32.totalorder %s21, 1
      %p131 = por %p129, %p130
      %p132 = scmp.ne.s32.totalorder %s121, %s122
      %p133 = scmp.eq.s32.totalorder %s21, 0
      %p134 = por %p132, %p133
      %p135 = scmp.ne.s32.totalorder %s121, %s122
      %p136 = scmp.eq.s32.totalorder %s22, 1
      %p137 = por %p135, %p136
      %p139 = scmp.ne.s32.totalorder %s122, %s138
      %p140 = scmp.eq.s32.totalorder %s22, 0
      %p141 = por %p139, %p140
      %s142 = ssub.s32 %s23, %s35
      %s143 = ssub.s32 %s24, %s31
      %s144 = sor.u32 %s142, %s143
      %p145 = scmp.eq.s32.totalorder %s144, 0
      %s147 = sadd.s32 %s146, 1
      %s148 = scalar_select %p145, %s146, %s147
      %p151 = pneg %p145
      %p152 = scmp.eq.s32.totalorder %s16, 1
      %p153 = por %p151, %p152
      %p154 = scmp.ne.s32.totalorder %s146, %s149
      %p155 = scmp.eq.s32.totalorder %s16, 0
      %p156 = por %p154, %p155
      %p157 = scmp.ne.s32.totalorder %s146, %s149
      %p158 = scmp.eq.s32.totalorder %s21, 1
      %p159 = por %p157, %p158
      %p160 = scmp.ne.s32.totalorder %s149, %s150
      %p161 = scmp.eq.s32.totalorder %s21, 0
      %p162 = por %p160, %p161
      %p163 = scmp.ne.s32.totalorder %s149, %s150
      %p164 = scmp.eq.s32.totalorder %s22, 1
      %p165 = por %p163, %p164
      %p167 = scmp.ne.s32.totalorder %s150, %s166
      %p168 = scmp.eq.s32.totalorder %s22, 0
      %p169 = por %p167, %p168
      %p170 = scmp.le.s32.totalorder 1, %s16
      %p171 = scmp.lt.s32.totalorder %s16, 3
      %p172 = pnand %p170, %p171
      %p173 = pneg %p172
      // Predicated region
      $region9: #{tpu_custom_call.1} parent=5 // pred_check
        _
      $region10: #{tpu_custom_call.1} parent=5 // pred_check_branch
        %175 = sbr.rel (%p172) target = $region12
      $region11: #{tpu_custom_call.1} parent=5 // pred_region
        %s176 = ssub.s32 %s16, 1
        // Predicated region
        $region13: #{tpu_custom_call.1} parent=11 // pred_check
          %p177 = pneg %p54
        $region14: #{tpu_custom_call.1} parent=11 // pred_check_branch
          %179 = sbr.rel (%p177) target = $region16
        $region15: #{tpu_custom_call.1} parent=11 // pred_region
          %s180 = smul.u32 4, %s26
          %p181 = scmp.lt.s32.totalorder %s180, 3
          %s182 = scalar_select %p181, %s180, 3
          %s183 = smul.addr %s182, 8
          %s184 = scalar_lea.vmem %s0, %s183
          %s185 = smul.u32 4, %s26
        $region16: #{tpu_custom_call.1} parent=11 // pred_fallthru
          _
        // Predicated region
        $region17: #{tpu_custom_call.1} parent=11 // pred_check
          %p186 = pneg %p80
        $region18: #{tpu_custom_call.1} parent=11 // pred_check_branch
          %188 = sbr.rel (%p186) target = $region20
        $region19: #{tpu_custom_call.1} parent=11 // pred_region
          %s189 = smul.u32 4, %s26
          %p190 = scmp.lt.s32.totalorder %s189, 3
          %s191 = scalar_select %p190, %s189, 3
          %s192 = smul.addr %s191, 8
          %s193 = scalar_lea.vmem %s1, %s192
          %s194 = smul.u32 4, %s26
        $region20: #{tpu_custom_call.1} parent=11 // pred_fallthru
          _
        // Predicated region
        $region21: #{tpu_custom_call.1} parent=11 // pred_check
          %p195 = pneg %p106
        $region22: #{tpu_custom_call.1} parent=11 // pred_check_branch
          %197 = sbr.rel (%p195) target = $region24
        $region23: #{tpu_custom_call.1} parent=11 // pred_region
          %s198 = smul.u32 4, %s26
          %p199 = scmp.lt.s32.totalorder %s198, 3
          %s200 = scalar_select %p199, %s198, 3
          %s201 = scalar_lea.vmem %s2, %s200
          %s202 = smul.u32 4, %s26
        $region24: #{tpu_custom_call.1} parent=11 // pred_fallthru
          _
      $region12: #{tpu_custom_call.1} parent=5 // pred_fallthru
        _
      %p203 = scmp.lt.s32.totalorder %s16, 2
      // Predicated region
      $region25: #{tpu_custom_call.1} parent=5 // pred_check
        %p204 = pneg %p203
      $region26: #{tpu_custom_call.1} parent=5 // pred_check_branch
        %206 = sbr.rel (%p204) target = $region28
      $region27: #{tpu_custom_call.1} parent=5 // pred_region
        // Predicated region
        $region29: #{tpu_custom_call.1} parent=27 // pred_check
          %p207 = pneg %p128
        $region30: #{tpu_custom_call.1} parent=27 // pred_check_branch
          %209 = sbr.rel (%p207) target = $region32
        $region31: #{tpu_custom_call.1} parent=27 // pred_region
          %s210 = sand.u32 %s118, 1
          %s211 = scalar_lea.sflag [#allocation4], %s210
          %s212 = sand.u32 %s118, 1
          %s213 = smul.addr %s212, 64
          %s214 = scalar_lea.vmem [#allocation3], %s213
          %s215 = smul.u32 4, %s24
          %s217 = ssub.s32 1024, 1024
          %218 = vsyncadd %s211, %s217
          %s219 = smul.addr %s215, 2
          %s220 = smul.addr %s23, 8
          %s221 = sadd.s32 %s219, %s220
          %s222 = smul.addr %s221, 128
          %s223 = scalar_lea.hbm %s3, %s222
          %s224 = sshll.u32 %s214, 4
          %s225 = int_to_ptr.vmem [resolvable:$true] %s224
          %230 = dma.hbm_to_vmem [thread:$0]  %s223, 1024, %s225, %s211, 128, 128, 8
        $region32: #{tpu_custom_call.1} parent=27 // pred_fallthru
          _
      $region28: #{tpu_custom_call.1} parent=5 // pred_fallthru
        _
      %p231 = scmp.le.s32.totalorder 1, %s16
      %p232 = scmp.lt.s32.totalorder %s16, 3
      %p233 = pnand %p231, %p232
      %p234 = pneg %p233
      // Predicated region
      $region33: #{tpu_custom_call.1} parent=5 // pred_check
        _
      $region34: #{tpu_custom_call.1} parent=5 // pred_check_branch
        %236 = sbr.rel (%p233) target = $region36
      $region35: #{tpu_custom_call.1} parent=5 // pred_region
        %s237 = ssub.s32 %s16, 1
        %s238 = sand.u32 %s121, 1
        %s239 = scalar_lea.sflag [#allocation4], %s238
        %s240 = sand.u32 %s121, 1
        %s241 = smul.addr %s240, 64
        %s242 = scalar_lea.vmem [#allocation3], %s241
        // Predicated region
        $region37: #{tpu_custom_call.1} parent=35 // pred_check
          %p243 = pneg %p134
        $region38: #{tpu_custom_call.1} parent=35 // pred_check_branch
          %245 = sbr.rel (%p243) target = $region40
        $region39: #{tpu_custom_call.1} parent=35 // pred_region
          %246 = dma.done %s239, 1024
        $region40: #{tpu_custom_call.1} parent=35 // pred_fallthru
          _
        %s247 = smul.u32 4, %s26
        %p248 = scmp.lt.s32.totalorder %s247, 3
        %s249 = scalar_select %p248, %s247, 3
        %s250 = smul.addr %s249, 8
        %s251 = scalar_lea.vmem %s0, %s250
        %p252 = pneg %p54
        %p253 = pneg %p51
        %s254 = smul.u32 4, %s26
        %p255 = scmp.lt.s32.totalorder %s254, 3
        %s256 = scalar_select %p255, %s254, 3
        %s257 = smul.addr %s256, 8
        %s258 = scalar_lea.vmem %s1, %s257
        %p259 = pneg %p80
        %p260 = pneg %p77
        %s261 = smul.u32 4, %s26
        %p262 = scmp.lt.s32.totalorder %s261, 3
        %s263 = scalar_select %p262, %s261, 3
        %s264 = scalar_lea.vmem %s2, %s263
        %p265 = pneg %p106
        %p266 = pneg %p103
        %s267 = sand.u32 %s121, 1
        %s268 = scalar_lea.sflag [#allocation4], %s267
        %s269 = sand.u32 %s121, 1
        %s270 = smul.addr %s269, 64
        %s271 = scalar_lea.vmem [#allocation3], %s270
        %p272 = pneg %p134
        %p273 = pneg %p131
        %p274 = pneg %p162
        %p275 = pneg %p159
        %s276 = sand.u32 %s149, 1
        %s277 = scalar_lea.sflag [#allocation5], %s276
        %s278 = sand.u32 %s149, 1
        %s279 = smul.addr %s278, 64
        %s280 = scalar_lea.vmem [#allocation6], %s279
        %s281 = smul.u32 4, %s26
        %p282 = scmp.lt.s32.totalorder %s281, 3
        %s283 = scalar_select %p282, %s281, 3
        %s284 = smul.addr %s283, 8
        %s285 = scalar_lea.vmem %s0, %s284
        %s286 = smul.u32 4, %s26
        %s287 = smul.u32 4, %s26
        %p288 = scmp.lt.s32.totalorder %s287, 3
        %s289 = scalar_select %p288, %s287, 3
        %s290 = smul.addr %s289, 8
        %s291 = scalar_lea.vmem %s1, %s290
        %s292 = smul.u32 4, %s26
        %s293 = smul.u32 4, %s26
        %p294 = scmp.lt.s32.totalorder %s293, 3
        %s295 = scalar_select %p294, %s293, 3
        %s296 = scalar_lea.vmem %s2, %s295
        %s297 = smul.u32 4, %s26
        %s298 = smul.u32 4, %s26
        %s299 = smul.u32 4, %s26
        %vm300 = vcmask 130053
        %301 = vst.msk [vmem:[#allocation2 + $0x8] sm:$0xe0] %vm300, 0.0
        %302 = vst.msk [vmem:[#allocation2 + $0x48] sm:$0xe0] %vm300, 0.0
        %303 = vst.msk [vmem:[#allocation2 + $0x88] sm:$0xe0] %vm300, 0.0
        %304 = vst.msk [vmem:[#allocation2 + $0xc8] sm:$0xe0] %vm300, 0.0
        %vm305 = vcmask 124928
        %306 = vst.msk [vmem:[#allocation2 + $0x38] sm:$0x7] %vm305, 0.0
        %307 = vst.msk [vmem:[#allocation2 + $0x78] sm:$0x7] %vm305, 0.0
        %308 = vst.msk [vmem:[#allocation2 + $0xb8] sm:$0x7] %vm305, 0.0
        %309 = vst.msk [vmem:[#allocation2 + $0xf8] sm:$0x7] %vm305, 0.0
        %vm310 = vcmask 1048552
        %311 = vst.msk [vmem:[#allocation2 + $0x10] sm:$0xff] %vm310, 0.0
        %312 = vst.msk [vmem:[#allocation2 + $0x20] sm:$0xff] %vm310, 0.0
        %313 = vst.msk [vmem:[#allocation2 + $0x50] sm:$0xff] %vm310, 0.0
        %314 = vst.msk [vmem:[#allocation2 + $0x60] sm:$0xff] %vm310, 0.0
        %315 = vst.msk [vmem:[#allocation2 + $0x90] sm:$0xff] %vm310, 0.0
        %316 = vst.msk [vmem:[#allocation2 + $0xa0] sm:$0xff] %vm310, 0.0
        %317 = vst.msk [vmem:[#allocation2 + $0xd0] sm:$0xff] %vm310, 0.0
        %318 = vst.msk [vmem:[#allocation2 + $0xe0] sm:$0xff] %vm310, 0.0
        %vm319 = vcmask 154752
        %320 = vst.msk [vmem:[#allocation2 + $0x18] sm:$0xff] %vm319, 0.0
        %321 = vst.msk [vmem:[#allocation2 + $0x28] sm:$0xff] %vm319, 0.0
        %322 = vst.msk [vmem:[#allocation2 + $0x58] sm:$0xff] %vm319, 0.0
        %323 = vst.msk [vmem:[#allocation2 + $0x68] sm:$0xff] %vm319, 0.0
        %324 = vst.msk [vmem:[#allocation2 + $0x98] sm:$0xff] %vm319, 0.0
        %325 = vst.msk [vmem:[#allocation2 + $0xa8] sm:$0xff] %vm319, 0.0
        %326 = vst.msk [vmem:[#allocation2 + $0xd8] sm:$0xff] %vm319, 0.0
        %327 = vst.msk [vmem:[#allocation2 + $0xe8] sm:$0xff] %vm319, 0.0
        %v328 = vld [vmem:[%s242] sm:$0xff]
        %v329 = vld [vmem:[%s242 + $0x8] sm:$0xff]
        %v330 = vld [vmem:[%s242 + $0x10] sm:$0xff]
        %v331 = vld [vmem:[%s242 + $0x18] sm:$0xff]
        %v332 = vld [vmem:[%s242 + $0x20] sm:$0xff]
        %v333 = vld [vmem:[%s242 + $0x28] sm:$0xff]
        %v334 = vld [vmem:[%s242 + $0x30] sm:$0xff]
        %v335 = vld [vmem:[%s242 + $0x38] sm:$0xff]
        %vm336 = vcmask 130048
        %337 = vst.msk [vmem:[#allocation2 + $0x18] sm:$0xff] %vm336, %v328
        %338 = vst.msk [vmem:[#allocation2 + $0x28] sm:$0xff] %vm336, %v329
        %339 = vst.msk [vmem:[#allocation2 + $0x58] sm:$0xff] %vm336, %v330
        %340 = vst.msk [vmem:[#allocation2 + $0x68] sm:$0xff] %vm336, %v331
        %341 = vst.msk [vmem:[#allocation2 + $0x98] sm:$0xff] %vm336, %v332
        %342 = vst.msk [vmem:[#allocation2 + $0xa8] sm:$0xff] %vm336, %v333
        %343 = vst.msk [vmem:[#allocation2 + $0xd8] sm:$0xff] %vm336, %v334
        %344 = vst.msk [vmem:[#allocation2 + $0xe8] sm:$0xff] %vm336, %v335
        %v345 = vld [vmem:[%s296] sm:$0x1]
        %v346 = vld [vmem:[%s296 + $0x1] sm:$0x1]
        %v347 = vld [vmem:[%s296 + $0x2] sm:$0x1]
        %v348 = vld [vmem:[%s296 + $0x3] sm:$0x1]
        %v349 = vld [vmem:[%s285] sm:$0x1]
        %v350 = vld [vmem:[%s285 + $0x8] sm:$0x1]
        %v351 = vld [vmem:[%s285 + $0x10] sm:$0x1]
        %v352 = vld [vmem:[%s285 + $0x18] sm:$0x1]
        %v353 = vld [vmem:[%s285 + $0x1] sm:$0x1]
        %v354 = vld [vmem:[%s285 + $0x9] sm:$0x1]
        %v355 = vld [vmem:[%s285 + $0x11] sm:$0x1]
        %v356 = vld [vmem:[%s285 + $0x19] sm:$0x1]
        %v357 = vld [vmem:[%s285 + $0x2] sm:$0x1]
        %v358 = vld [vmem:[%s285 + $0xa] sm:$0x1]
        %v359 = vld [vmem:[%s285 + $0x12] sm:$0x1]
        %v360 = vld [vmem:[%s285 + $0x1a] sm:$0x1]
        %v361 = vld [vmem:[%s285 + $0x3] sm:$0x1]
        %v362 = vld [vmem:[%s285 + $0xb] sm:$0x1]
        %v363 = vld [vmem:[%s285 + $0x13] sm:$0x1]
        %v364 = vld [vmem:[%s285 + $0x1b] sm:$0x1]
        %v365 = vld [vmem:[%s285 + $0x4] sm:$0x1]
        %v366 = vld [vmem:[%s285 + $0xc] sm:$0x1]
        %v367 = vld [vmem:[%s285 + $0x14] sm:$0x1]
        %v368 = vld [vmem:[%s285 + $0x1c] sm:$0x1]
        %v369 = vld [vmem:[%s285 + $0x5] sm:$0x1]
        %v370 = vld [vmem:[%s285 + $0xd] sm:$0x1]
        %v371 = vld [vmem:[%s285 + $0x15] sm:$0x1]
        %v372 = vld [vmem:[%s285 + $0x1d] sm:$0x1]
        %v373 = vld [vmem:[%s285 + $0x6] sm:$0x1]
        %v374 = vld [vmem:[%s285 + $0xe] sm:$0x1]
        %v375 = vld [vmem:[%s285 + $0x16] sm:$0x1]
        %v376 = vld [vmem:[%s285 + $0x1e] sm:$0x1]
        %v377 = vld [vmem:[%s291] sm:$0x1]
        %v378 = vld [vmem:[%s291 + $0x8] sm:$0x1]
        %v379 = vld [vmem:[%s291 + $0x10] sm:$0x1]
        %v380 = vld [vmem:[%s291 + $0x18] sm:$0x1]
        %v381 = vld [vmem:[%s291 + $0x1] sm:$0x1]
        %v382 = vld [vmem:[%s291 + $0x9] sm:$0x1]
        %v383 = vld [vmem:[%s291 + $0x11] sm:$0x1]
        %v384 = vld [vmem:[%s291 + $0x19] sm:$0x1]
        %v385 = vld [vmem:[%s291 + $0x2] sm:$0x1]
        %v386 = vld [vmem:[%s291 + $0xa] sm:$0x1]
        %v387 = vld [vmem:[%s291 + $0x12] sm:$0x1]
        %v388 = vld [vmem:[%s291 + $0x1a] sm:$0x1]
        %v389 = vld [vmem:[%s291 + $0x3] sm:$0x1]
        %v390 = vld [vmem:[%s291 + $0xb] sm:$0x1]
        %v391 = vld [vmem:[%s291 + $0x13] sm:$0x1]
        %v392 = vld [vmem:[%s291 + $0x1b] sm:$0x1]
        %v393 = vld [vmem:[%s291 + $0x4] sm:$0x1]
        %v394 = vld [vmem:[%s291 + $0xc] sm:$0x1]
        %v395 = vld [vmem:[%s291 + $0x14] sm:$0x1]
        %v396 = vld [vmem:[%s291 + $0x1c] sm:$0x1]
        %v397 = vld [vmem:[%s291 + $0x5] sm:$0x1]
        %v398 = vld [vmem:[%s291 + $0xd] sm:$0x1]
        %v399 = vld [vmem:[%s291 + $0x15] sm:$0x1]
        %v400 = vld [vmem:[%s291 + $0x1d] sm:$0x1]
        %v401 = vld [vmem:[%s291 + $0x6] sm:$0x1]
        %v402 = vld [vmem:[%s291 + $0xe] sm:$0x1]
        %v403 = vld [vmem:[%s291 + $0x16] sm:$0x1]
        %v404 = vld [vmem:[%s291 + $0x1e] sm:$0x1]
        %v405 = vld [vmem:[#allocation2 + $0x18] sm:$0xff]
        %v406 = vld [vmem:[#allocation2 + $0x28] sm:$0xff]
        %v407 = vld [vmem:[#allocation2 + $0x58] sm:$0xff]
        %v408 = vld [vmem:[#allocation2 + $0x68] sm:$0xff]
        %v409 = vld [vmem:[#allocation2 + $0x98] sm:$0xff]
        %v410 = vld [vmem:[#allocation2 + $0xa8] sm:$0xff]
        %v411 = vld [vmem:[#allocation2 + $0xd8] sm:$0xff]
        %v412 = vld [vmem:[#allocation2 + $0xe8] sm:$0xff]
        %v417 = vlaneseq
        %v418 = vshrl.u32 %v417, 7
        %v419 = vsub.s32 0, %v418
        %v420 = vrot.slane %v345, %v419
        %v421 = vlaneseq
        %v422 = vshrl.u32 %v421, 7
        %v423 = vsub.s32 0, %v422
        %v424 = vrot.slane %v346, %v423
        %v425 = vlaneseq
        %v426 = vshrl.u32 %v425, 7
        %v427 = vsub.s32 0, %v426
        %v428 = vrot.slane %v347, %v427
        %v429 = vlaneseq
        %v430 = vshrl.u32 %v429, 7
        %v431 = vsub.s32 0, %v430
        %v432 = vrot.slane %v348, %v431
        %433 = vset.pattern.permute.xlu0 0
        %434 = vperm.xlu0 %433, %v420
        %v435 = vpop.permute.xlu0 %434
        %437 = vset.pattern.permute.xlu0 0
        %438 = vperm.xlu0 %437, %v424
        %v439 = vpop.permute.xlu0 %438
        %441 = vset.pattern.permute.xlu0 0
        %442 = vperm.xlu0 %441, %v428
        %v443 = vpop.permute.xlu0 %442
        %445 = vset.pattern.permute.xlu0 0
        %446 = vperm.xlu0 %445, %v432
        %v447 = vpop.permute.xlu0 %446
        %v449 = vadd.f32 %v405, %v435
        %v450 = vadd.f32 %v406, %v435
        %v451 = vadd.f32 %v407, %v439
        %v452 = vadd.f32 %v408, %v439
        %v453 = vadd.f32 %v409, %v443
        %v454 = vadd.f32 %v410, %v443
        %v455 = vadd.f32 %v411, %v447
        %v456 = vadd.f32 %v412, %v447
        %v457 = vld [vmem:[#allocation2 + $0x8] sm:$0xe0]
        %v458 = vld [vmem:[#allocation2 + $0x28] sm:$0x1f]
        %v459 = vld [vmem:[#allocation2 + $0x48] sm:$0xe0]
        %v460 = vld [vmem:[#allocation2 + $0x68] sm:$0x1f]
        %v461 = vld [vmem:[#allocation2 + $0x88] sm:$0xe0]
        %v462 = vld [vmem:[#allocation2 + $0xa8] sm:$0x1f]
        %v463 = vld [vmem:[#allocation2 + $0xc8] sm:$0xe0]
        %v464 = vld [vmem:[#allocation2 + $0xe8] sm:$0x1f]
        %s466 = vtos %v349
        %v467 = vstv %s466
        %s470 = vtos %v350
        %v471 = vstv %s470
        %s474 = vtos %v351
        %v475 = vstv %s474
        %s478 = vtos %v352
        %v479 = vstv %s478
        %v481 = vmul.f32 %v467, %v457
        %v482 = vmul.f32 %v467, %v405
        %v483 = vmul.f32 %v467, %v458
        %v484 = vmul.f32 %v471, %v459
        %v485 = vmul.f32 %v471, %v407
        %v486 = vmul.f32 %v471, %v460
        %v487 = vmul.f32 %v475, %v461
        %v488 = vmul.f32 %v475, %v409
        %v489 = vmul.f32 %v475, %v462
        %v490 = vmul.f32 %v479, %v463
        %v491 = vmul.f32 %v479, %v411
        %v492 = vmul.f32 %v479, %v464
        %vm505 = vcmask 1042432
        %v506 = vrot.slane %v481, 5
        %v507 = vrot.slane %v482, 5
        %v508 = vsel %vm505, %v506, %v507
        %v509 = vrot.slane %v483, 5
        %v510 = vsel %vm505, %v507, %v509
        %v511 = vrot.slane %v484, 5
        %v512 = vrot.slane %v485, 5
        %v513 = vsel %vm505, %v511, %v512
        %v514 = vrot.slane %v486, 5
        %v515 = vsel %vm505, %v512, %v514
        %v516 = vrot.slane %v487, 5
        %v517 = vrot.slane %v488, 5
        %v518 = vsel %vm505, %v516, %v517
        %v519 = vrot.slane %v489, 5
        %v520 = vsel %vm505, %v517, %v519
        %v521 = vrot.slane %v490, 5
        %v522 = vrot.slane %v491, 5
        %v523 = vsel %vm505, %v521, %v522
        %v524 = vrot.slane %v492, 5
        %v525 = vsel %vm505, %v522, %v524
        %v534 = vadd.f32 %v449, %v508
        %v535 = vadd.f32 %v450, %v510
        %v536 = vadd.f32 %v451, %v513
        %v537 = vadd.f32 %v452, %v515
        %v538 = vadd.f32 %v453, %v518
        %v539 = vadd.f32 %v454, %v520
        %v540 = vadd.f32 %v455, %v523
        %v541 = vadd.f32 %v456, %v525
        %v542 = vld [vmem:[#allocation2 + $0x8] sm:$0xc0]
        %v543 = vld [vmem:[#allocation2 + $0x28] sm:$0x3f]
        %v544 = vld [vmem:[#allocation2 + $0x48] sm:$0xc0]
        %v545 = vld [vmem:[#allocation2 + $0x68] sm:$0x3f]
        %v546 = vld [vmem:[#allocation2 + $0x88] sm:$0xc0]
        %v547 = vld [vmem:[#allocation2 + $0xa8] sm:$0x3f]
        %v548 = vld [vmem:[#allocation2 + $0xc8] sm:$0xc0]
        %v549 = vld [vmem:[#allocation2 + $0xe8] sm:$0x3f]
        %s551 = vtos %v353
        %v552 = vstv %s551
        %s555 = vtos %v354
        %v556 = vstv %s555
        %s559 = vtos %v355
        %v560 = vstv %s559
        %s563 = vtos %v356
        %v564 = vstv %s563
        %v566 = vmul.f32 %v552, %v542
        %v567 = vmul.f32 %v552, %v405
        %v568 = vmul.f32 %v552, %v543
        %v569 = vmul.f32 %v556, %v544
        %v570 = vmul.f32 %v556, %v407
        %v571 = vmul.f32 %v556, %v545
        %v572 = vmul.f32 %v560, %v546
        %v573 = vmul.f32 %v560, %v409
        %v574 = vmul.f32 %v560, %v547
        %v575 = vmul.f32 %v564, %v548
        %v576 = vmul.f32 %v564, %v411
        %v577 = vmul.f32 %v564, %v549
        %vm590 = vcmask 1041408
        %v591 = vrot.slane %v566, 6
        %v592 = vrot.slane %v567, 6
        %v593 = vsel %vm590, %v591, %v592
        %v594 = vrot.slane %v568, 6
        %v595 = vsel %vm590, %v592, %v594
        %v596 = vrot.slane %v569, 6
        %v597 = vrot.slane %v570, 6
        %v598 = vsel %vm590, %v596, %v597
        %v599 = vrot.slane %v571, 6
        %v600 = vsel %vm590, %v597, %v599
        %v601 = vrot.slane %v572, 6
        %v602 = vrot.slane %v573, 6
        %v603 = vsel %vm590, %v601, %v602
        %v604 = vrot.slane %v574, 6
        %v605 = vsel %vm590, %v602, %v604
        %v606 = vrot.slane %v575, 6
        %v607 = vrot.slane %v576, 6
        %v608 = vsel %vm590, %v606, %v607
        %v609 = vrot.slane %v577, 6
        %v610 = vsel %vm590, %v607, %v609
        %v619 = vadd.f32 %v534, %v593
        %v620 = vadd.f32 %v535, %v595
        %v621 = vadd.f32 %v536, %v598
        %v622 = vadd.f32 %v537, %v600
        %v623 = vadd.f32 %v538, %v603
        %v624 = vadd.f32 %v539, %v605
        %v625 = vadd.f32 %v540, %v608
        %v626 = vadd.f32 %v541, %v610
        %v627 = vld [vmem:[#allocation2 + $0x8] sm:$0x80]
        %v628 = vld [vmem:[#allocation2 + $0x28] sm:$0x7f]
        %v629 = vld [vmem:[#allocation2 + $0x48] sm:$0x80]
        %v630 = vld [vmem:[#allocation2 + $0x68] sm:$0x7f]
        %v631 = vld [vmem:[#allocation2 + $0x88] sm:$0x80]
        %v632 = vld [vmem:[#allocation2 + $0xa8] sm:$0x7f]
        %v633 = vld [vmem:[#allocation2 + $0xc8] sm:$0x80]
        %v634 = vld [vmem:[#allocation2 + $0xe8] sm:$0x7f]
        %s636 = vtos %v357
        %v637 = vstv %s636
        %s640 = vtos %v358
        %v641 = vstv %s640
        %s644 = vtos %v359
        %v645 = vstv %s644
        %s648 = vtos %v360
        %v649 = vstv %s648
        %v651 = vmul.f32 %v637, %v627
        %v652 = vmul.f32 %v637, %v405
        %v653 = vmul.f32 %v637, %v628
        %v654 = vmul.f32 %v641, %v629
        %v655 = vmul.f32 %v641, %v407
        %v656 = vmul.f32 %v641, %v630
        %v657 = vmul.f32 %v645, %v631
        %v658 = vmul.f32 %v645, %v409
        %v659 = vmul.f32 %v645, %v632
        %v660 = vmul.f32 %v649, %v633
        %v661 = vmul.f32 %v649, %v411
        %v662 = vmul.f32 %v649, %v634
        %vm675 = vcmask 1040384
        %v676 = vrot.slane %v651, 7
        %v677 = vrot.slane %v652, 7
        %v678 = vsel %vm675, %v676, %v677
        %v679 = vrot.slane %v653, 7
        %v680 = vsel %vm675, %v677, %v679
        %v681 = vrot.slane %v654, 7
        %v682 = vrot.slane %v655, 7
        %v683 = vsel %vm675, %v681, %v682
        %v684 = vrot.slane %v656, 7
        %v685 = vsel %vm675, %v682, %v684
        %v686 = vrot.slane %v657, 7
        %v687 = vrot.slane %v658, 7
        %v688 = vsel %vm675, %v686, %v687
        %v689 = vrot.slane %v659, 7
        %v690 = vsel %vm675, %v687, %v689
        %v691 = vrot.slane %v660, 7
        %v692 = vrot.slane %v661, 7
        %v693 = vsel %vm675, %v691, %v692
        %v694 = vrot.slane %v662, 7
        %v695 = vsel %vm675, %v692, %v694
        %v704 = vadd.f32 %v619, %v678
        %v705 = vadd.f32 %v620, %v680
        %v706 = vadd.f32 %v621, %v683
        %v707 = vadd.f32 %v622, %v685
        %v708 = vadd.f32 %v623, %v688
        %v709 = vadd.f32 %v624, %v690
        %v710 = vadd.f32 %v625, %v693
        %v711 = vadd.f32 %v626, %v695
        %s713 = vtos %v361
        %v714 = vstv %s713
        %s717 = vtos %v362
        %v718 = vstv %s717
        %s721 = vtos %v363
        %v722 = vstv %s721
        %s725 = vtos %v364
        %v726 = vstv %s725
        %v728 = vmul.f32 %v714, %v405
        %v729 = vmul.f32 %v714, %v406
        %v730 = vmul.f32 %v718, %v407
        %v731 = vmul.f32 %v718, %v408
        %v732 = vmul.f32 %v722, %v409
        %v733 = vmul.f32 %v722, %v410
        %v734 = vmul.f32 %v726, %v411
        %v735 = vmul.f32 %v726, %v412
        %v736 = vadd.f32 %v704, %v728
        %v737 = vadd.f32 %v705, %v729
        %v738 = vadd.f32 %v706, %v730
        %v739 = vadd.f32 %v707, %v731
        %v740 = vadd.f32 %v708, %v732
        %v741 = vadd.f32 %v709, %v733
        %v742 = vadd.f32 %v710, %v734
        %v743 = vadd.f32 %v711, %v735
        %v744 = vld [vmem:[#allocation2 + $0x18] sm:$0xfe]
        %v745 = vld [vmem:[#allocation2 + $0x28] sm:$0xff]
        %v746 = vld [vmem:[#allocation2 + $0x38] sm:$0x1]
        %v747 = vld [vmem:[#allocation2 + $0x58] sm:$0xfe]
        %v748 = vld [vmem:[#allocation2 + $0x68] sm:$0xff]
        %v749 = vld [vmem:[#allocation2 + $0x78] sm:$0x1]
        %v750 = vld [vmem:[#allocation2 + $0x98] sm:$0xfe]
        %v751 = vld [vmem:[#allocation2 + $0xa8] sm:$0xff]
        %v752 = vld [vmem:[#allocation2 + $0xb8] sm:$0x1]
        %v753 = vld [vmem:[#allocation2 + $0xd8] sm:$0xfe]
        %v754 = vld [vmem:[#allocation2 + $0xe8] sm:$0xff]
        %v755 = vld [vmem:[#allocation2 + $0xf8] sm:$0x1]
        %s757 = vtos %v365
        %v758 = vstv %s757
        %s761 = vtos %v366
        %v762 = vstv %s761
        %s765 = vtos %v367
        %v766 = vstv %s765
        %s769 = vtos %v368
        %v770 = vstv %s769
        %v772 = vmul.f32 %v758, %v744
        %v773 = vmul.f32 %v758, %v745
        %v774 = vmul.f32 %v758, %v746
        %v775 = vmul.f32 %v762, %v747
        %v776 = vmul.f32 %v762, %v748
        %v777 = vmul.f32 %v762, %v749
        %v778 = vmul.f32 %v766, %v750
        %v779 = vmul.f32 %v766, %v751
        %v780 = vmul.f32 %v766, %v752
        %v781 = vmul.f32 %v770, %v753
        %v782 = vmul.f32 %v770, %v754
        %v783 = vmul.f32 %v770, %v755
        %vm796 = vcmask 1046528
        %v797 = vrot.slane %v772, 1
        %v798 = vrot.slane %v773, 1
        %v799 = vsel %vm796, %v797, %v798
        %v800 = vrot.slane %v774, 1
        %v801 = vsel %vm796, %v798, %v800
        %v802 = vrot.slane %v775, 1
        %v803 = vrot.slane %v776, 1
        %v804 = vsel %vm796, %v802, %v803
        %v805 = vrot.slane %v777, 1
        %v806 = vsel %vm796, %v803, %v805
        %v807 = vrot.slane %v778, 1
        %v808 = vrot.slane %v779, 1
        %v809 = vsel %vm796, %v807, %v808
        %v810 = vrot.slane %v780, 1
        %v811 = vsel %vm796, %v808, %v810
        %v812 = vrot.slane %v781, 1
        %v813 = vrot.slane %v782, 1
        %v814 = vsel %vm796, %v812, %v813
        %v815 = vrot.slane %v783, 1
        %v816 = vsel %vm796, %v813, %v815
        %v825 = vadd.f32 %v736, %v799
        %v826 = vadd.f32 %v737, %v801
        %v827 = vadd.f32 %v738, %v804
        %v828 = vadd.f32 %v739, %v806
        %v829 = vadd.f32 %v740, %v809
        %v830 = vadd.f32 %v741, %v811
        %v831 = vadd.f32 %v742, %v814
        %v832 = vadd.f32 %v743, %v816
        %v833 = vld [vmem:[#allocation2 + $0x18] sm:$0xfc]
        %v834 = vld [vmem:[#allocation2 + $0x38] sm:$0x3]
        %v835 = vld [vmem:[#allocation2 + $0x58] sm:$0xfc]
        %v836 = vld [vmem:[#allocation2 + $0x78] sm:$0x3]
        %v837 = vld [vmem:[#allocation2 + $0x98] sm:$0xfc]
        %v838 = vld [vmem:[#allocation2 + $0xb8] sm:$0x3]
        %v839 = vld [vmem:[#allocation2 + $0xd8] sm:$0xfc]
        %v840 = vld [vmem:[#allocation2 + $0xf8] sm:$0x3]
        %s842 = vtos %v369
        %v843 = vstv %s842
        %s846 = vtos %v370
        %v847 = vstv %s846
        %s850 = vtos %v371
        %v851 = vstv %s850
        %s854 = vtos %v372
        %v855 = vstv %s854
        %v857 = vmul.f32 %v843, %v833
        %v858 = vmul.f32 %v843, %v745
        %v859 = vmul.f32 %v843, %v834
        %v860 = vmul.f32 %v847, %v835
        %v861 = vmul.f32 %v847, %v748
        %v862 = vmul.f32 %v847, %v836
        %v863 = vmul.f32 %v851, %v837
        %v864 = vmul.f32 %v851, %v751
        %v865 = vmul.f32 %v851, %v838
        %v866 = vmul.f32 %v855, %v839
        %v867 = vmul.f32 %v855, %v754
        %v868 = vmul.f32 %v855, %v840
        %vm881 = vcmask 1045504
        %v882 = vrot.slane %v857, 2
        %v883 = vrot.slane %v858, 2
        %v884 = vsel %vm881, %v882, %v883
        %v885 = vrot.slane %v859, 2
        %v886 = vsel %vm881, %v883, %v885
        %v887 = vrot.slane %v860, 2
        %v888 = vrot.slane %v861, 2
        %v889 = vsel %vm881, %v887, %v888
        %v890 = vrot.slane %v862, 2
        %v891 = vsel %vm881, %v888, %v890
        %v892 = vrot.slane %v863, 2
        %v893 = vrot.slane %v864, 2
        %v894 = vsel %vm881, %v892, %v893
        %v895 = vrot.slane %v865, 2
        %v896 = vsel %vm881, %v893, %v895
        %v897 = vrot.slane %v866, 2
        %v898 = vrot.slane %v867, 2
        %v899 = vsel %vm881, %v897, %v898
        %v900 = vrot.slane %v868, 2
        %v901 = vsel %vm881, %v898, %v900
        %v910 = vadd.f32 %v825, %v884
        %v911 = vadd.f32 %v826, %v886
        %v912 = vadd.f32 %v827, %v889
        %v913 = vadd.f32 %v828, %v891
        %v914 = vadd.f32 %v829, %v894
        %v915 = vadd.f32 %v830, %v896
        %v916 = vadd.f32 %v831, %v899
        %v917 = vadd.f32 %v832, %v901
        %v918 = vld [vmem:[#allocation2 + $0x18] sm:$0xf8]
        %v919 = vld [vmem:[#allocation2 + $0x38] sm:$0x7]
        %v920 = vld [vmem:[#allocation2 + $0x58] sm:$0xf8]
        %v921 = vld [vmem:[#allocation2 + $0x78] sm:$0x7]
        %v922 = vld [vmem:[#allocation2 + $0x98] sm:$0xf8]
        %v923 = vld [vmem:[#allocation2 + $0xb8] sm:$0x7]
        %v924 = vld [vmem:[#allocation2 + $0xd8] sm:$0xf8]
        %v925 = vld [vmem:[#allocation2 + $0xf8] sm:$0x7]
        %s927 = vtos %v373
        %v928 = vstv %s927
        %s931 = vtos %v374
        %v932 = vstv %s931
        %s935 = vtos %v375
        %v936 = vstv %s935
        %s939 = vtos %v376
        %v940 = vstv %s939
        %v942 = vmul.f32 %v928, %v918
        %v943 = vmul.f32 %v928, %v745
        %v944 = vmul.f32 %v928, %v919
        %v945 = vmul.f32 %v932, %v920
        %v946 = vmul.f32 %v932, %v748
        %v947 = vmul.f32 %v932, %v921
        %v948 = vmul.f32 %v936, %v922
        %v949 = vmul.f32 %v936, %v751
        %v950 = vmul.f32 %v936, %v923
        %v951 = vmul.f32 %v940, %v924
        %v952 = vmul.f32 %v940, %v754
        %v953 = vmul.f32 %v940, %v925
        %vm966 = vcmask 1044480
        %v967 = vrot.slane %v942, 3
        %v968 = vrot.slane %v943, 3
        %v969 = vsel %vm966, %v967, %v968
        %v970 = vrot.slane %v944, 3
        %v971 = vsel %vm966, %v968, %v970
        %v972 = vrot.slane %v945, 3
        %v973 = vrot.slane %v946, 3
        %v974 = vsel %vm966, %v972, %v973
        %v975 = vrot.slane %v947, 3
        %v976 = vsel %vm966, %v973, %v975
        %v977 = vrot.slane %v948, 3
        %v978 = vrot.slane %v949, 3
        %v979 = vsel %vm966, %v977, %v978
        %v980 = vrot.slane %v950, 3
        %v981 = vsel %vm966, %v978, %v980
        %v982 = vrot.slane %v951, 3
        %v983 = vrot.slane %v952, 3
        %v984 = vsel %vm966, %v982, %v983
        %v985 = vrot.slane %v953, 3
        %v986 = vsel %vm966, %v983, %v985
        %v995 = vadd.f32 %v910, %v969
        %v996 = vadd.f32 %v911, %v971
        %v997 = vadd.f32 %v912, %v974
        %v998 = vadd.f32 %v913, %v976
        %v999 = vadd.f32 %v914, %v979
        %v1000 = vadd.f32 %v915, %v981
        %v1001 = vadd.f32 %v916, %v984
        %v1002 = vadd.f32 %v917, %v986
        %v1003 = vld [vmem:[#allocation2 + $0x10] sm:$0xff]
        %v1004 = vld [vmem:[#allocation2 + $0x20] sm:$0xff]
        %v1005 = vld [vmem:[#allocation2 + $0x50] sm:$0xff]
        %v1006 = vld [vmem:[#allocation2 + $0x60] sm:$0xff]
        %v1007 = vld [vmem:[#allocation2 + $0x90] sm:$0xff]
        %v1008 = vld [vmem:[#allocation2 + $0xa0] sm:$0xff]
        %v1009 = vld [vmem:[#allocation2 + $0xd0] sm:$0xff]
        %v1010 = vld [vmem:[#allocation2 + $0xe0] sm:$0xff]
        %s1012 = vtos %v377
        %v1013 = vstv %s1012
        %s1016 = vtos %v378
        %v1017 = vstv %s1016
        %s1020 = vtos %v379
        %v1021 = vstv %s1020
        %s1024 = vtos %v380
        %v1025 = vstv %s1024
        %v1027 = vmul.f32 %v1013, %v1003
        %v1028 = vmul.f32 %v1013, %v405
        %v1029 = vmul.f32 %v1013, %v1004
        %v1030 = vmul.f32 %v1013, %v406
        %v1031 = vmul.f32 %v1017, %v1005
        %v1032 = vmul.f32 %v1017, %v407
        %v1033 = vmul.f32 %v1017, %v1006
        %v1034 = vmul.f32 %v1017, %v408
        %v1035 = vmul.f32 %v1021, %v1007
        %v1036 = vmul.f32 %v1021, %v409
        %v1037 = vmul.f32 %v1021, %v1008
        %v1038 = vmul.f32 %v1021, %v410
        %v1039 = vmul.f32 %v1025, %v1009
        %v1040 = vmul.f32 %v1025, %v411
        %v1041 = vmul.f32 %v1025, %v1010
        %v1042 = vmul.f32 %v1025, %v412
        %1059 = vrot.lane.b32.xlu0 %v1027, 3
        %v1060 = vpop.permute.xlu0 %1059
        %1061 = vrot.lane.b32.xlu0 %v1028, 3
        %v1062 = vpop.permute.xlu0 %1061
        %1063 = vrot.lane.b32.xlu0 %v1029, 3
        %v1064 = vpop.permute.xlu0 %1063
        %1065 = vrot.lane.b32.xlu0 %v1030, 3
        %v1066 = vpop.permute.xlu0 %1065
        %1067 = vrot.lane.b32.xlu0 %v1031, 3
        %v1068 = vpop.permute.xlu0 %1067
        %1069 = vrot.lane.b32.xlu0 %v1032, 3
        %v1070 = vpop.permute.xlu0 %1069
        %1071 = vrot.lane.b32.xlu0 %v1033, 3
        %v1072 = vpop.permute.xlu0 %1071
        %1073 = vrot.lane.b32.xlu0 %v1034, 3
        %v1074 = vpop.permute.xlu0 %1073
        %1075 = vrot.lane.b32.xlu0 %v1035, 3
        %v1076 = vpop.permute.xlu0 %1075
        %1077 = vrot.lane.b32.xlu0 %v1036, 3
        %v1078 = vpop.permute.xlu0 %1077
        %1079 = vrot.lane.b32.xlu0 %v1037, 3
        %v1080 = vpop.permute.xlu0 %1079
        %1081 = vrot.lane.b32.xlu0 %v1038, 3
        %v1082 = vpop.permute.xlu0 %1081
        %1083 = vrot.lane.b32.xlu0 %v1039, 3
        %v1084 = vpop.permute.xlu0 %1083
        %1085 = vrot.lane.b32.xlu0 %v1040, 3
        %v1086 = vpop.permute.xlu0 %1085
        %1087 = vrot.lane.b32.xlu0 %v1041, 3
        %v1088 = vpop.permute.xlu0 %1087
        %1089 = vrot.lane.b32.xlu0 %v1042, 3
        %v1090 = vpop.permute.xlu0 %1089
        %vm1091 = vcmask 23552
        %v1092 = vsel %vm1091, %v1060, %v1062
        %v1093 = vsel %vm1091, %v1064, %v1066
        %v1094 = vsel %vm1091, %v1068, %v1070
        %v1095 = vsel %vm1091, %v1072, %v1074
        %v1096 = vsel %vm1091, %v1076, %v1078
        %v1097 = vsel %vm1091, %v1080, %v1082
        %v1098 = vsel %vm1091, %v1084, %v1086
        %v1099 = vsel %vm1091, %v1088, %v1090
        %v1108 = vadd.f32 %v995, %v1092
        %v1109 = vadd.f32 %v996, %v1093
        %v1110 = vadd.f32 %v997, %v1094
        %v1111 = vadd.f32 %v998, %v1095
        %v1112 = vadd.f32 %v999, %v1096
        %v1113 = vadd.f32 %v1000, %v1097
        %v1114 = vadd.f32 %v1001, %v1098
        %v1115 = vadd.f32 %v1002, %v1099
        %s1117 = vtos %v381
        %v1118 = vstv %s1117
        %s1121 = vtos %v382
        %v1122 = vstv %s1121
        %s1125 = vtos %v383
        %v1126 = vstv %s1125
        %s1129 = vtos %v384
        %v1130 = vstv %s1129
        %v1132 = vmul.f32 %v1118, %v1003
        %v1133 = vmul.f32 %v1118, %v405
        %v1134 = vmul.f32 %v1118, %v1004
        %v1135 = vmul.f32 %v1118, %v406
        %v1136 = vmul.f32 %v1122, %v1005
        %v1137 = vmul.f32 %v1122, %v407
        %v1138 = vmul.f32 %v1122, %v1006
        %v1139 = vmul.f32 %v1122, %v408
        %v1140 = vmul.f32 %v1126, %v1007
        %v1141 = vmul.f32 %v1126, %v409
        %v1142 = vmul.f32 %v1126, %v1008
        %v1143 = vmul.f32 %v1126, %v410
        %v1144 = vmul.f32 %v1130, %v1009
        %v1145 = vmul.f32 %v1130, %v411
        %v1146 = vmul.f32 %v1130, %v1010
        %v1147 = vmul.f32 %v1130, %v412
        %1164 = vrot.lane.b32.xlu0 %v1132, 2
        %v1165 = vpop.permute.xlu0 %1164
        %1166 = vrot.lane.b32.xlu0 %v1133, 2
        %v1167 = vpop.permute.xlu0 %1166
        %1168 = vrot.lane.b32.xlu0 %v1134, 2
        %v1169 = vpop.permute.xlu0 %1168
        %1170 = vrot.lane.b32.xlu0 %v1135, 2
        %v1171 = vpop.permute.xlu0 %1170
        %1172 = vrot.lane.b32.xlu0 %v1136, 2
        %v1173 = vpop.permute.xlu0 %1172
        %1174 = vrot.lane.b32.xlu0 %v1137, 2
        %v1175 = vpop.permute.xlu0 %1174
        %1176 = vrot.lane.b32.xlu0 %v1138, 2
        %v1177 = vpop.permute.xlu0 %1176
        %1178 = vrot.lane.b32.xlu0 %v1139, 2
        %v1179 = vpop.permute.xlu0 %1178
        %1180 = vrot.lane.b32.xlu0 %v1140, 2
        %v1181 = vpop.permute.xlu0 %1180
        %1182 = vrot.lane.b32.xlu0 %v1141, 2
        %v1183 = vpop.permute.xlu0 %1182
        %1184 = vrot.lane.b32.xlu0 %v1142, 2
        %v1185 = vpop.permute.xlu0 %1184
        %1186 = vrot.lane.b32.xlu0 %v1143, 2
        %v1187 = vpop.permute.xlu0 %1186
        %1188 = vrot.lane.b32.xlu0 %v1144, 2
        %v1189 = vpop.permute.xlu0 %1188
        %1190 = vrot.lane.b32.xlu0 %v1145, 2
        %v1191 = vpop.permute.xlu0 %1190
        %1192 = vrot.lane.b32.xlu0 %v1146, 2
        %v1193 = vpop.permute.xlu0 %1192
        %1194 = vrot.lane.b32.xlu0 %v1147, 2
        %v1195 = vpop.permute.xlu0 %1194
        %vm1196 = vcmask 15360
        %v1197 = vsel %vm1196, %v1165, %v1167
        %v1198 = vsel %vm1196, %v1169, %v1171
        %v1199 = vsel %vm1196, %v1173, %v1175
        %v1200 = vsel %vm1196, %v1177, %v1179
        %v1201 = vsel %vm1196, %v1181, %v1183
        %v1202 = vsel %vm1196, %v1185, %v1187
        %v1203 = vsel %vm1196, %v1189, %v1191
        %v1204 = vsel %vm1196, %v1193, %v1195
        %v1213 = vadd.f32 %v1108, %v1197
        %v1214 = vadd.f32 %v1109, %v1198
        %v1215 = vadd.f32 %v1110, %v1199
        %v1216 = vadd.f32 %v1111, %v1200
        %v1217 = vadd.f32 %v1112, %v1201
        %v1218 = vadd.f32 %v1113, %v1202
        %v1219 = vadd.f32 %v1114, %v1203
        %v1220 = vadd.f32 %v1115, %v1204
        %s1222 = vtos %v385
        %v1223 = vstv %s1222
        %s1226 = vtos %v386
        %v1227 = vstv %s1226
        %s1230 = vtos %v387
        %v1231 = vstv %s1230
        %s1234 = vtos %v388
        %v1235 = vstv %s1234
        %v1237 = vmul.f32 %v1223, %v1003
        %v1238 = vmul.f32 %v1223, %v405
        %v1239 = vmul.f32 %v1223, %v1004
        %v1240 = vmul.f32 %v1223, %v406
        %v1241 = vmul.f32 %v1227, %v1005
        %v1242 = vmul.f32 %v1227, %v407
        %v1243 = vmul.f32 %v1227, %v1006
        %v1244 = vmul.f32 %v1227, %v408
        %v1245 = vmul.f32 %v1231, %v1007
        %v1246 = vmul.f32 %v1231, %v409
        %v1247 = vmul.f32 %v1231, %v1008
        %v1248 = vmul.f32 %v1231, %v410
        %v1249 = vmul.f32 %v1235, %v1009
        %v1250 = vmul.f32 %v1235, %v411
        %v1251 = vmul.f32 %v1235, %v1010
        %v1252 = vmul.f32 %v1235, %v412
        %1269 = vrot.lane.b32.xlu0 %v1237, 1
        %v1270 = vpop.permute.xlu0 %1269
        %1271 = vrot.lane.b32.xlu0 %v1238, 1
        %v1272 = vpop.permute.xlu0 %1271
        %1273 = vrot.lane.b32.xlu0 %v1239, 1
        %v1274 = vpop.permute.xlu0 %1273
        %1275 = vrot.lane.b32.xlu0 %v1240, 1
        %v1276 = vpop.permute.xlu0 %1275
        %1277 = vrot.lane.b32.xlu0 %v1241, 1
        %v1278 = vpop.permute.xlu0 %1277
        %1279 = vrot.lane.b32.xlu0 %v1242, 1
        %v1280 = vpop.permute.xlu0 %1279
        %1281 = vrot.lane.b32.xlu0 %v1243, 1
        %v1282 = vpop.permute.xlu0 %1281
        %1283 = vrot.lane.b32.xlu0 %v1244, 1
        %v1284 = vpop.permute.xlu0 %1283
        %1285 = vrot.lane.b32.xlu0 %v1245, 1
        %v1286 = vpop.permute.xlu0 %1285
        %1287 = vrot.lane.b32.xlu0 %v1246, 1
        %v1288 = vpop.permute.xlu0 %1287
        %1289 = vrot.lane.b32.xlu0 %v1247, 1
        %v1290 = vpop.permute.xlu0 %1289
        %1291 = vrot.lane.b32.xlu0 %v1248, 1
        %v1292 = vpop.permute.xlu0 %1291
        %1293 = vrot.lane.b32.xlu0 %v1249, 1
        %v1294 = vpop.permute.xlu0 %1293
        %1295 = vrot.lane.b32.xlu0 %v1250, 1
        %v1296 = vpop.permute.xlu0 %1295
        %1297 = vrot.lane.b32.xlu0 %v1251, 1
        %v1298 = vpop.permute.xlu0 %1297
        %1299 = vrot.lane.b32.xlu0 %v1252, 1
        %v1300 = vpop.permute.xlu0 %1299
        %vm1301 = vcmask 7168
        %v1302 = vsel %vm1301, %v1270, %v1272
        %v1303 = vsel %vm1301, %v1274, %v1276
        %v1304 = vsel %vm1301, %v1278, %v1280
        %v1305 = vsel %vm1301, %v1282, %v1284
        %v1306 = vsel %vm1301, %v1286, %v1288
        %v1307 = vsel %vm1301, %v1290, %v1292
        %v1308 = vsel %vm1301, %v1294, %v1296
        %v1309 = vsel %vm1301, %v1298, %v1300
        %v1318 = vadd.f32 %v1213, %v1302
        %v1319 = vadd.f32 %v1214, %v1303
        %v1320 = vadd.f32 %v1215, %v1304
        %v1321 = vadd.f32 %v1216, %v1305
        %v1322 = vadd.f32 %v1217, %v1306
        %v1323 = vadd.f32 %v1218, %v1307
        %v1324 = vadd.f32 %v1219, %v1308
        %v1325 = vadd.f32 %v1220, %v1309
        %s1327 = vtos %v389
        %v1328 = vstv %s1327
        %s1331 = vtos %v390
        %v1332 = vstv %s1331
        %s1335 = vtos %v391
        %v1336 = vstv %s1335
        %s1339 = vtos %v392
        %v1340 = vstv %s1339
        %v1342 = vmul.f32 %v1328, %v405
        %v1343 = vmul.f32 %v1328, %v406
        %v1344 = vmul.f32 %v1332, %v407
        %v1345 = vmul.f32 %v1332, %v408
        %v1346 = vmul.f32 %v1336, %v409
        %v1347 = vmul.f32 %v1336, %v410
        %v1348 = vmul.f32 %v1340, %v411
        %v1349 = vmul.f32 %v1340, %v412
        %v1350 = vadd.f32 %v1318, %v1342
        %v1351 = vadd.f32 %v1319, %v1343
        %v1352 = vadd.f32 %v1320, %v1344
        %v1353 = vadd.f32 %v1321, %v1345
        %v1354 = vadd.f32 %v1322, %v1346
        %v1355 = vadd.f32 %v1323, %v1347
        %v1356 = vadd.f32 %v1324, %v1348
        %v1357 = vadd.f32 %v1325, %v1349
        %s1359 = vtos %v393
        %v1360 = vstv %s1359
        %s1363 = vtos %v394
        %v1364 = vstv %s1363
        %s1367 = vtos %v395
        %v1368 = vstv %s1367
        %s1371 = vtos %v396
        %v1372 = vstv %s1371
        %v1374 = vmul.f32 %v1360, %v405
        %v1375 = vmul.f32 %v1360, %v406
        %v1376 = vmul.f32 %v1364, %v407
        %v1377 = vmul.f32 %v1364, %v408
        %v1378 = vmul.f32 %v1368, %v409
        %v1379 = vmul.f32 %v1368, %v410
        %v1380 = vmul.f32 %v1372, %v411
        %v1381 = vmul.f32 %v1372, %v412
        %1390 = vrot.lane.b32.xlu0 %v1374, 127
        %v1391 = vpop.permute.xlu0 %1390
        %1392 = vrot.lane.b32.xlu0 %v1375, 127
        %v1393 = vpop.permute.xlu0 %1392
        %1394 = vrot.lane.b32.xlu0 %v1376, 127
        %v1395 = vpop.permute.xlu0 %1394
        %1396 = vrot.lane.b32.xlu0 %v1377, 127
        %v1397 = vpop.permute.xlu0 %1396
        %1398 = vrot.lane.b32.xlu0 %v1378, 127
        %v1399 = vpop.permute.xlu0 %1398
        %1400 = vrot.lane.b32.xlu0 %v1379, 127
        %v1401 = vpop.permute.xlu0 %1400
        %1402 = vrot.lane.b32.xlu0 %v1380, 127
        %v1403 = vpop.permute.xlu0 %1402
        %1404 = vrot.lane.b32.xlu0 %v1381, 127
        %v1405 = vpop.permute.xlu0 %1404
        %v1414 = vadd.f32 %v1350, %v1391
        %v1415 = vadd.f32 %v1351, %v1393
        %v1416 = vadd.f32 %v1352, %v1395
        %v1417 = vadd.f32 %v1353, %v1397
        %v1418 = vadd.f32 %v1354, %v1399
        %v1419 = vadd.f32 %v1355, %v1401
        %v1420 = vadd.f32 %v1356, %v1403
        %v1421 = vadd.f32 %v1357, %v1405
        %s1423 = vtos %v397
        %v1424 = vstv %s1423
        %s1427 = vtos %v398
        %v1428 = vstv %s1427
        %s1431 = vtos %v399
        %v1432 = vstv %s1431
        %s1435 = vtos %v400
        %v1436 = vstv %s1435
        %v1438 = vmul.f32 %v1424, %v405
        %v1439 = vmul.f32 %v1424, %v406
        %v1440 = vmul.f32 %v1428, %v407
        %v1441 = vmul.f32 %v1428, %v408
        %v1442 = vmul.f32 %v1432, %v409
        %v1443 = vmul.f32 %v1432, %v410
        %v1444 = vmul.f32 %v1436, %v411
        %v1445 = vmul.f32 %v1436, %v412
        %1454 = vrot.lane.b32.xlu0 %v1438, 126
        %v1455 = vpop.permute.xlu0 %1454
        %1456 = vrot.lane.b32.xlu0 %v1439, 126
        %v1457 = vpop.permute.xlu0 %1456
        %1458 = vrot.lane.b32.xlu0 %v1440, 126
        %v1459 = vpop.permute.xlu0 %1458
        %1460 = vrot.lane.b32.xlu0 %v1441, 126
        %v1461 = vpop.permute.xlu0 %1460
        %1462 = vrot.lane.b32.xlu0 %v1442, 126
        %v1463 = vpop.permute.xlu0 %1462
        %1464 = vrot.lane.b32.xlu0 %v1443, 126
        %v1465 = vpop.permute.xlu0 %1464
        %1466 = vrot.lane.b32.xlu0 %v1444, 126
        %v1467 = vpop.permute.xlu0 %1466
        %1468 = vrot.lane.b32.xlu0 %v1445, 126
        %v1469 = vpop.permute.xlu0 %1468
        %v1478 = vadd.f32 %v1414, %v1455
        %v1479 = vadd.f32 %v1415, %v1457
        %v1480 = vadd.f32 %v1416, %v1459
        %v1481 = vadd.f32 %v1417, %v1461
        %v1482 = vadd.f32 %v1418, %v1463
        %v1483 = vadd.f32 %v1419, %v1465
        %v1484 = vadd.f32 %v1420, %v1467
        %v1485 = vadd.f32 %v1421, %v1469
        %s1487 = vtos %v401
        %v1488 = vstv %s1487
        %s1491 = vtos %v402
        %v1492 = vstv %s1491
        %s1495 = vtos %v403
        %v1496 = vstv %s1495
        %s1499 = vtos %v404
        %v1500 = vstv %s1499
        %v1502 = vmul.f32 %v1488, %v405
        %v1503 = vmul.f32 %v1488, %v406
        %v1504 = vmul.f32 %v1492, %v407
        %v1505 = vmul.f32 %v1492, %v408
        %v1506 = vmul.f32 %v1496, %v409
        %v1507 = vmul.f32 %v1496, %v410
        %v1508 = vmul.f32 %v1500, %v411
        %v1509 = vmul.f32 %v1500, %v412
        %1518 = vrot.lane.b32.xlu0 %v1502, 125
        %v1519 = vpop.permute.xlu0 %1518
        %1520 = vrot.lane.b32.xlu0 %v1503, 125
        %v1521 = vpop.permute.xlu0 %1520
        %1522 = vrot.lane.b32.xlu0 %v1504, 125
        %v1523 = vpop.permute.xlu0 %1522
        %1524 = vrot.lane.b32.xlu0 %v1505, 125
        %v1525 = vpop.permute.xlu0 %1524
        %1526 = vrot.lane.b32.xlu0 %v1506, 125
        %v1527 = vpop.permute.xlu0 %1526
        %1528 = vrot.lane.b32.xlu0 %v1507, 125
        %v1529 = vpop.permute.xlu0 %1528
        %1530 = vrot.lane.b32.xlu0 %v1508, 125
        %v1531 = vpop.permute.xlu0 %1530
        %1532 = vrot.lane.b32.xlu0 %v1509, 125
        %v1533 = vpop.permute.xlu0 %1532
        %v1542 = vadd.f32 %v1478, %v1519
        %v1543 = vadd.f32 %v1479, %v1521
        %v1544 = vadd.f32 %v1480, %v1523
        %v1545 = vadd.f32 %v1481, %v1525
        %v1546 = vadd.f32 %v1482, %v1527
        %v1547 = vadd.f32 %v1483, %v1529
        %v1548 = vadd.f32 %v1484, %v1531
        %v1549 = vadd.f32 %v1485, %v1533
        %1550 = vst.msk [vmem:[%s280] sm:$0xff] %vm336, %v1542
        %1551 = vst.msk [vmem:[%s280 + $0x8] sm:$0xff] %vm336, %v1543
        %1552 = vst.msk [vmem:[%s280 + $0x10] sm:$0xff] %vm336, %v1544
        %1553 = vst.msk [vmem:[%s280 + $0x18] sm:$0xff] %vm336, %v1545
        %1554 = vst.msk [vmem:[%s280 + $0x20] sm:$0xff] %vm336, %v1546
        %1555 = vst.msk [vmem:[%s280 + $0x28] sm:$0xff] %vm336, %v1547
        %1556 = vst.msk [vmem:[%s280 + $0x30] sm:$0xff] %vm336, %v1548
        %1557 = vst.msk [vmem:[%s280 + $0x38] sm:$0xff] %vm336, %v1549
        %s1558 = sand.u32 %s149, 1
        %s1559 = scalar_lea.sflag [#allocation5], %s1558
        %s1560 = sand.u32 %s149, 1
        %s1561 = smul.addr %s1560, 64
        %s1562 = scalar_lea.vmem [#allocation6], %s1561
        // Predicated region
        $region41: #{tpu_custom_call.1} parent=35 // pred_check
          %p1563 = pneg %p159
        $region42: #{tpu_custom_call.1} parent=35 // pred_check_branch
          %1565 = sbr.rel (%p1563) target = $region44
        $region43: #{tpu_custom_call.1} parent=35 // pred_region
          %s1566 = smul.u32 4, %s26
          %s1568 = ssub.s32 1024, 1024
          %1569 = vsyncadd %s1559, %s1568
          %s1570 = smul.addr %s1566, 2
          %s1571 = smul.addr %s25, 8
          %s1572 = sadd.s32 %s1570, %s1571
          %s1573 = smul.addr %s1572, 128
          %s1574 = scalar_lea.hbm %s4, %s1573
          %s1575 = sshll.u32 %s1562, 4
          %s1576 = int_to_ptr.vmem [resolvable:$true] %s1575
          %1581 = dma.vmem_to_hbm [thread:$0]  %s1576, 1024, %s1574, %s1559, 128, 128, 8
        $region44: #{tpu_custom_call.1} parent=35 // pred_fallthru
          _
      $region36: #{tpu_custom_call.1} parent=5 // pred_fallthru
        _
      %p1582 = scmp.le.s32.totalorder 2, %s16
      // Predicated region
      $region45: #{tpu_custom_call.1} parent=5 // pred_check
        %p1583 = pneg %p1582
      $region46: #{tpu_custom_call.1} parent=5 // pred_check_branch
        %1585 = sbr.rel (%p1583) target = $region48
      $region47: #{tpu_custom_call.1} parent=5 // pred_region
        %s1586 = ssub.s32 %s16, 2
        // Predicated region
        $region49: #{tpu_custom_call.1} parent=47 // pred_check
          %p1587 = pneg %p165
        $region50: #{tpu_custom_call.1} parent=47 // pred_check_branch
          %1589 = sbr.rel (%p1587) target = $region52
        $region51: #{tpu_custom_call.1} parent=47 // pred_region
          %s1590 = sand.u32 %s150, 1
          %s1591 = scalar_lea.sflag [#allocation5], %s1590
          %s1592 = sand.u32 %s150, 1
          %s1593 = smul.addr %s1592, 64
          %s1594 = scalar_lea.vmem [#allocation6], %s1593
          %1595 = dma.done %s1591, 1024
        $region52: #{tpu_custom_call.1} parent=47 // pred_fallthru
          _
      $region48: #{tpu_custom_call.1} parent=5 // pred_fallthru
        _
    $region6: #{tpu_custom_call.1} parent=1 // loop_footer
      %s20 = sadd.s32 1, %s16
    $region7: #{tpu_custom_call.1} parent=1 // loop_footer_branch
      %15 = sbr.rel target = $region3
    $region8: #{tpu_custom_call.1} parent=1 // loop_exit
      _
    %1596 = vsyncpa [#allocation4], 1
    %s1597 = scalar_lea.sflag [#allocation4], 1
    %1598 = vsyncpa %s1597, 1
    %1599 = vsyncpa [#allocation5], 1
    %s1600 = scalar_lea.sflag [#allocation5], 1
    %1601 = vsyncpa %s1600, 1

</llo_original>
